<compile_context>
chip_gen: v6e
topology: v6e:2x2x1
jax: 0.10.0
libtpu: 0.0.40
codegen_flags: <defaults>
</compile_context>

<pallas_src>
import math
from functools import partial

import jax
import jax.numpy as jnp
from jax import lax
from jax.experimental import pallas as pl
from jax.experimental.pallas import tpu as pltpu

_MASK_BIAS = 1e30      # additive bias applied to masked key positions
_NEG_INIT = -1e37      # initial running max (finite; below any biased score)
_MASKED_ROW = -1e29    # final m below this  ==>  the row had no valid key at all


def _flash_attention_kernel(q_ref, k_ref, v_ref, im_ref, tm_ref, o_ref,
                            q_sc, m_sc, l_sc, acc_sc,
                            *, scale, use_kv_bias, use_q_gate,
                            num_heads, e_head, d_head):
    st = pl.program_id(2)

    @pl.when(st == 0)
    def _init():
        # Softmax scale folded into Q once per L-tile (Q block is constant
        # across the S axis, so this is pure hoisted work).
        q_sc[...] = (q_ref[0].astype(jnp.float32) * scale).astype(jnp.bfloat16)
        m_sc[...] = jnp.full(m_sc.shape, _NEG_INIT, dtype=m_sc.dtype)
        l_sc[...] = jnp.zeros(l_sc.shape, dtype=l_sc.dtype)
        acc_sc[...] = jnp.zeros(acc_sc.shape, dtype=acc_sc.dtype)

    k = k_ref[0]                                      # (TS, H*E) bf16
    v = v_ref[0]                                      # (TS, H*D) bf16

    if use_kv_bias:
        # Key-side additive bias only (1, TS); shared by all heads.  The
        # query-side instruct_mask is applied at finalize instead of building
        # a full (TL, TS) bias tensor every step.
        tm_bias = (tm_ref[0] - 1.0) * _MASK_BIAS      # (1, TS) f32

    # TODO(synk): for H >= 8 switch this static unroll to lax.fori_loop with
    # pl.ds head slices to bound vreg live ranges.
    for h in range(num_heads):
        qh = q_sc[:, h * e_head:(h + 1) * e_head]     # (TL, E) bf16, pre-scaled
        kh = k[:, h * e_head:(h + 1) * e_head]        # (TS, E) bf16
        vh = v[:, h * d_head:(h + 1) * d_head]        # (TS, D) bf16

        # Contract E directly against K's natural (S, E) layout (no k.T).
        s = lax.dot_general(qh, kh, (((1,), (1,)), ((), ())),
                            preferred_element_type=jnp.float32)   # (TL, TS) f32
        if use_kv_bias:
            s = s + tm_bias

        m_prev = m_sc[h]                                           # (TL, 1)
        m_new = jnp.maximum(m_prev, jnp.max(s, axis=-1, keepdims=True))
        alpha = jnp.exp(m_prev - m_new)                            # (TL, 1)
        p = jnp.exp(s - m_new)                                     # (TL, TS)
        l_sc[h] = alpha * l_sc[h] + jnp.sum(p, axis=-1, keepdims=True)
        acc_sc[:, h * d_head:(h + 1) * d_head] = (
            alpha * acc_sc[:, h * d_head:(h + 1) * d_head]
            + jnp.dot(p.astype(jnp.bfloat16), vh,
                      preferred_element_type=jnp.float32))
        m_sc[h] = m_new

    @pl.when(st == pl.num_programs(2) - 1)
    def _finalize():
        if use_q_gate:
            im_valid = im_ref[0] > 0.0                 # (TL, 1) bool
        outs = []
        for h in range(num_heads):
            # Deferred normalization: EUP reciprocal + O(TL*D) multiply.
            inv = pl.reciprocal(l_sc[h], approx=True)  # (TL, 1)
            o_h = acc_sc[:, h * d_head:(h + 1) * d_head] * inv
            if use_q_gate:
                # Zero rows that are query-masked OR had no valid key at all,
                # matching torch softmax -> NaN -> nan_to_num(0).
                valid = jnp.logical_and(m_sc[h] > _MASKED_ROW, im_valid)
                o_h = jnp.where(valid, o_h, 0.0)
            outs.append(o_h)
        # Single lane-dense (TL, H*D) store.
        o_ref[0] = jnp.concatenate(outs, axis=-1).astype(o_ref.dtype)


def _round_up(x, m):
    return (x + m - 1) // m * m


def _choose_tile(n, candidates):
    """Return (tile, padded_extent)."""
    for t in candidates:
        if t <= n and n % t == 0:
            return t, n                      # exact tiling, no padding
    if n <= candidates[-1]:
        return n, n                          # small extent: single full block
    # Pad to a multiple of the largest candidate that fits (<= one tile waste).
    t = candidates[-1]
    for c in candidates:
        if c <= n:
            t = c
            break
    return t, _round_up(n, t)


def _vmem_estimate(blk_l, blk_s, he, hd, h, out_bytes):
    def tile(r, c, b):
        return _round_up(r, 8) * _round_up(c, 128) * b
    n = 0
    # double-buffered pipelined blocks (q/k/v bf16, masks f32, out)
    n += 2 * (tile(blk_l, he, 2) + tile(blk_s, he, 2) + tile(blk_s, hd, 2)
              + tile(blk_l, 1, 4) + tile(1, blk_s, 4)
              + tile(blk_l, hd, out_bytes))
    # persistent scratch: scaled-Q (bf16), per-head m/l, lane-dense f32 acc
    n += tile(blk_l, he, 2) + h * 2 * tile(blk_l, 1, 4) + tile(blk_l, hd, 4)
    # per-head (TL, TS) f32 score / prob intermediates (spill headroom)
    n += 3 * tile(blk_l, blk_s, 4)
    return n


@partial(jax.jit, static_argnames=("mask_flag", "scale"))
def full_attention(queries, keys, values, instruct_mask, ts_mask,
                   mask_flag=True, scale=None):
    """Matches FullAttention.forward (eval mode, output_attention=False)."""
    B, L, H, E = queries.shape
    _, S, _, D = values.shape
    scale = float(scale) if scale is not None else 1.0 / math.sqrt(E)
    out_dtype = queries.dtype

    # Free trailing-dim merges + one-time bf16 cast (no transposes).
    q = queries.reshape(B, L, H * E).astype(jnp.bfloat16)
    k = keys.reshape(B, S, H * E).astype(jnp.bfloat16)
    v = values.reshape(B, S, H * D).astype(jnp.bfloat16)

    if mask_flag:
        im = instruct_mask.astype(jnp.float32).reshape(B, L, 1)
        tm = ts_mask[..., 0].astype(jnp.float32).reshape(B, 1, S)
    else:
        im = jnp.ones((B, L, 1), jnp.float32)
        tm = jnp.ones((B, 1, S), jnp.float32)

    # Tile choice: large L-tiles to fill the 256-row MXU and cut K/V
    # re-streaming; S-tile capped so per-head (TL, TS) f32 tiles stay <= ~32
    # vregs (keeps the softmax chain register-resident).
    blk_l, l_pad = _choose_tile(L, (256, 128, 64, 32, 16, 8))
    blk_s, s_pad = _choose_tile(S, (256, 128))
    if blk_l * blk_s > 128 * 256 and blk_s == 256:
        blk_s = 128                               # s_pad % 128 == 0 by construction

    # Dual-TensorCore chips (v7x): make sure both cores get parallel work.
    while B * (l_pad // blk_l) < 2 and blk_l >= 16 and l_pad % (blk_l // 2) == 0:
        blk_l //= 2

    # Pad non-divisible extents; padded keys are masked via the key-side bias.
    if l_pad != L:
        q = jnp.pad(q, ((0, 0), (0, l_pad - L), (0, 0)))
        im = jnp.pad(im, ((0, 0), (0, l_pad - L), (0, 0)))
    if s_pad != S:
        k = jnp.pad(k, ((0, 0), (0, s_pad - S), (0, 0)))
        v = jnp.pad(v, ((0, 0), (0, s_pad - S), (0, 0)))
        tm = jnp.pad(tm, ((0, 0), (0, 0), (0, s_pad - S)))

    use_kv_bias = bool(mask_flag) or (s_pad != S)
    use_q_gate = bool(mask_flag)

    grid = (B, l_pad // blk_l, s_pad // blk_s)

    kernel = partial(_flash_attention_kernel, scale=scale,
                     use_kv_bias=use_kv_bias, use_q_gate=use_q_gate,
                     num_heads=H, e_head=E, d_head=D)

    vmem_bytes = _vmem_estimate(blk_l, blk_s, H * E, H * D, H,
                                jnp.dtype(out_dtype).itemsize)
    try:
        info = pltpu.get_tpu_info()
        vmem_cap = int(getattr(info, "vmem_capacity_bytes", 64 * 2**20))
    except Exception:
        vmem_cap = 64 * 2**20
    hard_cap = max(16 * 2**20, vmem_cap - 12 * 2**20)   # leave headroom
    vmem_limit = int(min(hard_cap, max(24 * 2**20, int(vmem_bytes * 1.5))))

    out = pl.pallas_call(
        kernel,
        out_shape=jax.ShapeDtypeStruct((B, l_pad, H * D), out_dtype),
        grid_spec=pltpu.PrefetchScalarGridSpec(
            num_scalar_prefetch=0,
            grid=grid,
            in_specs=[
                pl.BlockSpec((1, blk_l, H * E), lambda b, i, j: (b, i, 0)),
                pl.BlockSpec((1, blk_s, H * E), lambda b, i, j: (b, j, 0)),
                pl.BlockSpec((1, blk_s, H * D), lambda b, i, j: (b, j, 0)),
                pl.BlockSpec((1, blk_l, 1), lambda b, i, j: (b, i, 0)),
                pl.BlockSpec((1, 1, blk_s), lambda b, i, j: (b, 0, j)),
            ],
            out_specs=pl.BlockSpec((1, blk_l, H * D), lambda b, i, j: (b, i, 0)),
            scratch_shapes=[
                pltpu.VMEM((blk_l, H * E), jnp.bfloat16),   # pre-scaled Q tile
                pltpu.VMEM((H, blk_l, 1), jnp.float32),     # running max m
                pltpu.VMEM((H, blk_l, 1), jnp.float32),     # running denom l
                pltpu.VMEM((blk_l, H * D), jnp.float32),    # lane-dense acc
            ],
        ),
        compiler_params=pltpu.CompilerParams(
            dimension_semantics=("parallel", "parallel", "arbitrary"),
            vmem_limit_bytes=vmem_limit,
        ),
    )(q, k, v, im, tm)

    V = out[:, :L, :].reshape(B, L, H, D)   # drop L padding, free reshape back
    return V, None


def _reference_full_attention(queries, keys, values, instruct_mask, ts_mask,
                              mask_flag=True, scale=None):
    """Pure-JAX f32 reference mirroring the PyTorch code (eval mode)."""
    B, L, H, E = queries.shape
    scale = scale if scale is not None else 1.0 / math.sqrt(E)
    scores = jnp.einsum('blhe,bshe->bhls', queries, keys)
    if mask_flag:
        tsm = ts_mask[..., 0]
        mask = ~jnp.logical_and(instruct_mask[:, None, :, None],
                                tsm[:, None, None, :])
        scores = jnp.where(mask, -jnp.inf, scores)
    A = jax.nn.softmax(scale * scores, axis=-1)
    A = jnp.nan_to_num(A, nan=0.0, posinf=1.0, neginf=0.0)
    return jnp.einsum('bhls,bshd->blhd', A, values)


if __name__ == "__main__":
    B, L, S, H, E, D = 2, 8, 8, 4, 32, 32

    key = jax.random.PRNGKey(0)
    kq, kk, kv, kim, ktm = jax.random.split(key, 5)
    queries = jax.random.normal(kq, (B, L, H, E), dtype=jnp.float32)
    keys = jax.random.normal(kk, (B, S, H, E), dtype=jnp.float32)
    values = jax.random.normal(kv, (B, S, H, D), dtype=jnp.float32)
    instruct_mask = jax.random.bernoulli(kim, 0.7, (B, L))          # bool [B, L]
    ts_mask = jax.random.bernoulli(ktm, 0.7, (B, S, 2))             # bool [B, S, 2]

    V, attn = full_attention(queries, keys, values, instruct_mask, ts_mask,
                             mask_flag=True)
    V = jax.block_until_ready(V)
    assert attn is None
    assert V.shape == (B, L, H, D)

    V_ref = _reference_full_attention(queries, keys, values, instruct_mask,
                                      ts_mask, mask_flag=True)
    # bf16 MXU inputs -> expect ~1e-2-level quantization vs the f32 reference.
    err = float(jnp.max(jnp.abs(V - V_ref)))
    assert jnp.allclose(V, V_ref, atol=2e-2, rtol=2e-2), f"mismatch, max|err|={err}"

    # Also exercise the unmasked path.
    V2, _ = full_attention(queries, keys, values, instruct_mask, ts_mask,
                           mask_flag=False)
    V2 = jax.block_until_ready(V2)
    V2_ref = _reference_full_attention(queries, keys, values, instruct_mask,
                                       ts_mask, mask_flag=False)
    assert jnp.allclose(V2, V2_ref, atol=2e-2, rtol=2e-2), "mismatch (no mask)"

    print("KERNEL_OK")
</pallas_src>

<mosaic_0001>
module attributes {stable_mosaic.version = 11 : i64} {
  func.func @_flash_attention_kernel(%arg0: i32, %arg1: i32, %arg2: i32, %arg3: memref<1x8x128xbf16, #tpu.memory_space<vmem>>, %arg4: memref<1x8x128xbf16, #tpu.memory_space<vmem>>, %arg5: memref<1x8x128xbf16, #tpu.memory_space<vmem>>, %arg6: memref<1x8x1xf32, #tpu.memory_space<vmem>>, %arg7: memref<1x1x8xf32, #tpu.memory_space<vmem>>, %arg8: memref<1x8x128xf32, #tpu.memory_space<vmem>>, %arg9: memref<8x128xbf16, #tpu.memory_space<vmem>>, %arg10: memref<4x8x1xf32, #tpu.memory_space<vmem>>, %arg11: memref<4x8x1xf32, #tpu.memory_space<vmem>>, %arg12: memref<8x128xf32, #tpu.memory_space<vmem>>) attributes {dimension_semantics = [#tpu.dimension_semantics<parallel>, #tpu.dimension_semantics<parallel>, #tpu.dimension_semantics<arbitrary>], iteration_bounds = array<i64: 2, 1, 1>, scalar_prefetch = 0 : i64, scratch_operands = 4 : i64, tpu.core_type = #tpu.core_type<tc>, window_params = [{transform_indices = @transform_0, window_bounds = array<i64: 1, 8, 128>}, {transform_indices = @transform_1, window_bounds = array<i64: 1, 8, 128>}, {transform_indices = @transform_2, window_bounds = array<i64: 1, 8, 128>}, {transform_indices = @transform_3, window_bounds = array<i64: 1, 8, 1>}, {transform_indices = @transform_4, window_bounds = array<i64: 1, 1, 8>}, {transform_indices = @transform_5, window_bounds = array<i64: 1, 8, 128>}]} {
    %c0_i32 = arith.constant 0 : i32
    %0 = arith.cmpi eq, %arg2, %c0_i32 : i32
    %1 = arith.extui %0 : i1 to i32
    %c0_i32_0 = arith.constant 0 : i32
    %2 = arith.cmpi ne, %1, %c0_i32_0 : i32
    scf.if %2 {
      %c0_94 = arith.constant 0 : index
      %c0_95 = arith.constant 0 : index
      %c0_96 = arith.constant 0 : index
      %156 = vector.load %arg3[%c0_94, %c0_95, %c0_96] : memref<1x8x128xbf16, #tpu.memory_space<vmem>>, vector<1x8x128xbf16>
      %157 = vector.shape_cast %156 : vector<1x8x128xbf16> to vector<8x128xbf16>
      %158 = arith.extf %157 : vector<8x128xbf16> to vector<8x128xf32>
      %cst_97 = arith.constant 0.176776692 : f32
      %159 = vector.broadcast %cst_97 : f32 to vector<8x128xf32>
      %160 = arith.mulf %158, %159 : vector<8x128xf32>
      %161 = arith.truncf %160 : vector<8x128xf32> to vector<8x128xbf16>
      %c0_98 = arith.constant 0 : index
      %c0_99 = arith.constant 0 : index
      %162 = vector.load %arg9[%c0_98, %c0_99] : memref<8x128xbf16, #tpu.memory_space<vmem>>, vector<8x128xbf16>
      tpu.vector_store %arg9[%c0_98, %c0_99], %161 {strides = array<i32>} : memref<8x128xbf16, #tpu.memory_space<vmem>>, vector<8x128xbf16>,
      %cst_100 = arith.constant -9.99999993E+36 : f32
      %163 = vector.broadcast %cst_100 : f32 to vector<4x8x1xf32>
      %c0_101 = arith.constant 0 : index
      %c0_102 = arith.constant 0 : index
      %c0_103 = arith.constant 0 : index
      %164 = vector.load %arg10[%c0_101, %c0_102, %c0_103] : memref<4x8x1xf32, #tpu.memory_space<vmem>>, vector<4x8x1xf32>
      tpu.vector_store %arg10[%c0_101, %c0_102, %c0_103], %163 {strides = array<i32>} : memref<4x8x1xf32, #tpu.memory_space<vmem>>, vector<4x8x1xf32>,
      %cst_104 = arith.constant 0.000000e+00 : f32
      %165 = vector.broadcast %cst_104 : f32 to vector<4x8x1xf32>
      %c0_105 = arith.constant 0 : index
      %c0_106 = arith.constant 0 : index
      %c0_107 = arith.constant 0 : index
      %166 = vector.load %arg11[%c0_105, %c0_106, %c0_107] : memref<4x8x1xf32, #tpu.memory_space<vmem>>, vector<4x8x1xf32>
      tpu.vector_store %arg11[%c0_105, %c0_106, %c0_107], %165 {strides = array<i32>} : memref<4x8x1xf32, #tpu.memory_space<vmem>>, vector<4x8x1xf32>,
      %cst_108 = arith.constant 0.000000e+00 : f32
      %167 = vector.broadcast %cst_108 : f32 to vector<8x128xf32>
      %c0_109 = arith.constant 0 : index
      %c0_110 = arith.constant 0 : index
      %168 = vector.load %arg12[%c0_109, %c0_110] : memref<8x128xf32, #tpu.memory_space<vmem>>, vector<8x128xf32>
      tpu.vector_store %arg12[%c0_109, %c0_110], %167 {strides = array<i32>} : memref<8x128xf32, #tpu.memory_space<vmem>>, vector<8x128xf32>,
    } else {
    }
    %c0 = arith.constant 0 : index
    %c0_1 = arith.constant 0 : index
    %c0_2 = arith.constant 0 : index
    %3 = vector.load %arg4[%c0, %c0_1, %c0_2] : memref<1x8x128xbf16, #tpu.memory_space<vmem>>, vector<1x8x128xbf16>
    %4 = vector.shape_cast %3 : vector<1x8x128xbf16> to vector<8x128xbf16>
    %c0_3 = arith.constant 0 : index
    %c0_4 = arith.constant 0 : index
    %c0_5 = arith.constant 0 : index
    %5 = vector.load %arg5[%c0_3, %c0_4, %c0_5] : memref<1x8x128xbf16, #tpu.memory_space<vmem>>, vector<1x8x128xbf16>
    %6 = vector.shape_cast %5 : vector<1x8x128xbf16> to vector<8x128xbf16>
    %c0_6 = arith.constant 0 : index
    %c0_7 = arith.constant 0 : index
    %c0_8 = arith.constant 0 : index
    %7 = vector.load %arg7[%c0_6, %c0_7, %c0_8] : memref<1x1x8xf32, #tpu.memory_space<vmem>>, vector<1x1x8xf32>
    %8 = vector.shape_cast %7 : vector<1x1x8xf32> to vector<1x8xf32>
    %cst = arith.constant 1.000000e+00 : f32
    %9 = vector.broadcast %cst : f32 to vector<1x8xf32>
    %10 = arith.subf %8, %9 : vector<1x8xf32>
    %cst_9 = arith.constant 1.000000e+30 : f32
    %11 = vector.broadcast %cst_9 : f32 to vector<1x8xf32>
    %12 = arith.mulf %10, %11 : vector<1x8xf32>
    %c0_10 = arith.constant 0 : index
    %c0_11 = arith.constant 0 : index
    %13 = vector.load %arg9[%c0_10, %c0_11] : memref<8x128xbf16, #tpu.memory_space<vmem>>, vector<8x32xbf16>
    %14 = vector.extract_strided_slice %4 {offsets = [0, 0], sizes = [8, 32], strides = [1, 1]} : vector<8x128xbf16> to vector<8x32xbf16>
    %15 = vector.extract_strided_slice %6 {offsets = [0, 0], sizes = [8, 32], strides = [1, 1]} : vector<8x128xbf16> to vector<8x32xbf16>
    %cst_12 = arith.constant dense<0.000000e+00> : vector<8x8xf32>
    %16 = tpu.matmul %13, %14, %cst_12 {dimension_numbers = #tpu.dot_dimension_numbers<[1], [1], [0], [0], [0, 0, 1, 0], [], []>} : vector<8x32xbf16>, vector<8x32xbf16>, vector<8x8xf32> -> vector<8x8xf32>
    %17 = vector.broadcast %12 : vector<1x8xf32> to vector<8x8xf32>
    %18 = arith.addf %16, %17 : vector<8x8xf32>
    %c0_13 = arith.constant 0 : index
    %c0_14 = arith.constant 0 : index
    %c0_15 = arith.constant 0 : index
    %19 = vector.load %arg10[%c0_13, %c0_14, %c0_15] : memref<4x8x1xf32, #tpu.memory_space<vmem>>, vector<1x8x1xf32>
    %20 = vector.shape_cast %19 : vector<1x8x1xf32> to vector<8x1xf32>
    %cst_16 = arith.constant dense<0xFF800000> : vector<8xf32>
    %21 = vector.multi_reduction <maximumf>, %18, %cst_16 [1] : vector<8x8xf32> to vector<8xf32>
    %22 = vector.shape_cast %21 : vector<8xf32> to vector<8x1xf32>
    %23 = arith.maximumf %20, %22 : vector<8x1xf32>
    %24 = arith.subf %20, %23 : vector<8x1xf32>
    %25 = math.exp %24 : vector<8x1xf32>
    %26 = vector.broadcast %23 : vector<8x1xf32> to vector<8x8xf32>
    %27 = arith.subf %18, %26 : vector<8x8xf32>
    %28 = math.exp %27 : vector<8x8xf32>
    %c0_17 = arith.constant 0 : index
    %c0_18 = arith.constant 0 : index
    %c0_19 = arith.constant 0 : index
    %29 = vector.load %arg11[%c0_17, %c0_18, %c0_19] : memref<4x8x1xf32, #tpu.memory_space<vmem>>, vector<1x8x1xf32>
    %30 = vector.shape_cast %29 : vector<1x8x1xf32> to vector<8x1xf32>
    %31 = arith.mulf %25, %30 : vector<8x1xf32>
    %cst_20 = arith.constant dense<0.000000e+00> : vector<8xf32>
    %32 = vector.multi_reduction <add>, %28, %cst_20 [1] : vector<8x8xf32> to vector<8xf32>
    %33 = vector.shape_cast %32 : vector<8xf32> to vector<8x1xf32>
    %34 = arith.addf %31, %33 : vector<8x1xf32>
    %c0_21 = arith.constant 0 : index
    %c0_22 = arith.constant 0 : index
    %c0_23 = arith.constant 0 : index
    %35 = vector.load %arg11[%c0_21, %c0_22, %c0_23] : memref<4x8x1xf32, #tpu.memory_space<vmem>>, vector<1x8x1xf32>
    %36 = vector.shape_cast %35 : vector<1x8x1xf32> to vector<8x1xf32>
    %37 = vector.shape_cast %34 : vector<8x1xf32> to vector<1x8x1xf32>
    tpu.vector_store %arg11[%c0_21, %c0_22, %c0_23], %37 {strides = array<i32>} : memref<4x8x1xf32, #tpu.memory_space<vmem>>, vector<1x8x1xf32>,
    %c0_24 = arith.constant 0 : index
    %c0_25 = arith.constant 0 : index
    %38 = vector.load %arg12[%c0_24, %c0_25] : memref<8x128xf32, #tpu.memory_space<vmem>>, vector<8x32xf32>
    %39 = vector.broadcast %25 : vector<8x1xf32> to vector<8x32xf32>
    %40 = arith.mulf %39, %38 : vector<8x32xf32>
    %41 = arith.truncf %28 : vector<8x8xf32> to vector<8x8xbf16>
    %cst_26 = arith.constant dense<0.000000e+00> : vector<8x32xf32>
    %42 = tpu.matmul %41, %15, %cst_26 {dimension_numbers = #tpu.dot_dimension_numbers<[1], [0], [0], [1], [0, 0, 1, 1], [], []>} : vector<8x8xbf16>, vector<8x32xbf16>, vector<8x32xf32> -> vector<8x32xf32>
    %43 = arith.addf %40, %42 : vector<8x32xf32>
    %c0_27 = arith.constant 0 : index
    %c0_28 = arith.constant 0 : index
    %44 = vector.load %arg12[%c0_27, %c0_28] : memref<8x128xf32, #tpu.memory_space<vmem>>, vector<8x32xf32>
    tpu.vector_store %arg12[%c0_27, %c0_28], %43 {strides = array<i32>} : memref<8x128xf32, #tpu.memory_space<vmem>>, vector<8x32xf32>,
    %c0_29 = arith.constant 0 : index
    %c0_30 = arith.constant 0 : index
    %c0_31 = arith.constant 0 : index
    %45 = vector.load %arg10[%c0_29, %c0_30, %c0_31] : memref<4x8x1xf32, #tpu.memory_space<vmem>>, vector<1x8x1xf32>
    %46 = vector.shape_cast %45 : vector<1x8x1xf32> to vector<8x1xf32>
    %47 = vector.shape_cast %23 : vector<8x1xf32> to vector<1x8x1xf32>
    tpu.vector_store %arg10[%c0_29, %c0_30, %c0_31], %47 {strides = array<i32>} : memref<4x8x1xf32, #tpu.memory_space<vmem>>, vector<1x8x1xf32>,
    %c0_32 = arith.constant 0 : index
    %c32 = arith.constant 32 : index
    %48 = vector.load %arg9[%c0_32, %c32] : memref<8x128xbf16, #tpu.memory_space<vmem>>, vector<8x32xbf16>
    %49 = vector.extract_strided_slice %4 {offsets = [0, 32], sizes = [8, 32], strides = [1, 1]} : vector<8x128xbf16> to vector<8x32xbf16>
    %50 = vector.extract_strided_slice %6 {offsets = [0, 32], sizes = [8, 32], strides = [1, 1]} : vector<8x128xbf16> to vector<8x32xbf16>
    %cst_33 = arith.constant dense<0.000000e+00> : vector<8x8xf32>
    %51 = tpu.matmul %48, %49, %cst_33 {dimension_numbers = #tpu.dot_dimension_numbers<[1], [1], [0], [0], [0, 0, 1, 0], [], []>} : vector<8x32xbf16>, vector<8x32xbf16>, vector<8x8xf32> -> vector<8x8xf32>
    %52 = vector.broadcast %12 : vector<1x8xf32> to vector<8x8xf32>
    %53 = arith.addf %51, %52 : vector<8x8xf32>
    %c1 = arith.constant 1 : index
    %c0_34 = arith.constant 0 : index
    %c0_35 = arith.constant 0 : index
    %54 = vector.load %arg10[%c1, %c0_34, %c0_35] : memref<4x8x1xf32, #tpu.memory_space<vmem>>, vector<1x8x1xf32>
    %55 = vector.shape_cast %54 : vector<1x8x1xf32> to vector<8x1xf32>
    %cst_36 = arith.constant dense<0xFF800000> : vector<8xf32>
    %56 = vector.multi_reduction <maximumf>, %53, %cst_36 [1] : vector<8x8xf32> to vector<8xf32>
    %57 = vector.shape_cast %56 : vector<8xf32> to vector<8x1xf32>
    %58 = arith.maximumf %55, %57 : vector<8x1xf32>
    %59 = arith.subf %55, %58 : vector<8x1xf32>
    %60 = math.exp %59 : vector<8x1xf32>
    %61 = vector.broadcast %58 : vector<8x1xf32> to vector<8x8xf32>
    %62 = arith.subf %53, %61 : vector<8x8xf32>
    %63 = math.exp %62 : vector<8x8xf32>
    %c1_37 = arith.constant 1 : index
    %c0_38 = arith.constant 0 : index
    %c0_39 = arith.constant 0 : index
    %64 = vector.load %arg11[%c1_37, %c0_38, %c0_39] : memref<4x8x1xf32, #tpu.memory_space<vmem>>, vector<1x8x1xf32>
    %65 = vector.shape_cast %64 : vector<1x8x1xf32> to vector<8x1xf32>
    %66 = arith.mulf %60, %65 : vector<8x1xf32>
    %cst_40 = arith.constant dense<0.000000e+00> : vector<8xf32>
    %67 = vector.multi_reduction <add>, %63, %cst_40 [1] : vector<8x8xf32> to vector<8xf32>
    %68 = vector.shape_cast %67 : vector<8xf32> to vector<8x1xf32>
    %69 = arith.addf %66, %68 : vector<8x1xf32>
    %c1_41 = arith.constant 1 : index
    %c0_42 = arith.constant 0 : index
    %c0_43 = arith.constant 0 : index
    %70 = vector.load %arg11[%c1_41, %c0_42, %c0_43] : memref<4x8x1xf32, #tpu.memory_space<vmem>>, vector<1x8x1xf32>
    %71 = vector.shape_cast %70 : vector<1x8x1xf32> to vector<8x1xf32>
    %72 = vector.shape_cast %69 : vector<8x1xf32> to vector<1x8x1xf32>
    tpu.vector_store %arg11[%c1_41, %c0_42, %c0_43], %72 {strides = array<i32>} : memref<4x8x1xf32, #tpu.memory_space<vmem>>, vector<1x8x1xf32>,
    %c0_44 = arith.constant 0 : index
    %c32_45 = arith.constant 32 : index
    %73 = vector.load %arg12[%c0_44, %c32_45] : memref<8x128xf32, #tpu.memory_space<vmem>>, vector<8x32xf32>
    %74 = vector.broadcast %60 : vector<8x1xf32> to vector<8x32xf32>
    %75 = arith.mulf %74, %73 : vector<8x32xf32>
    %76 = arith.truncf %63 : vector<8x8xf32> to vector<8x8xbf16>
    %cst_46 = arith.constant dense<0.000000e+00> : vector<8x32xf32>
    %77 = tpu.matmul %76, %50, %cst_46 {dimension_numbers = #tpu.dot_dimension_numbers<[1], [0], [0], [1], [0, 0, 1, 1], [], []>} : vector<8x8xbf16>, vector<8x32xbf16>, vector<8x32xf32> -> vector<8x32xf32>
    %78 = arith.addf %75, %77 : vector<8x32xf32>
    %c0_47 = arith.constant 0 : index
    %c32_48 = arith.constant 32 : index
    %79 = vector.load %arg12[%c0_47, %c32_48] : memref<8x128xf32, #tpu.memory_space<vmem>>, vector<8x32xf32>
    tpu.vector_store %arg12[%c0_47, %c32_48], %78 {strides = array<i32>} : memref<8x128xf32, #tpu.memory_space<vmem>>, vector<8x32xf32>,
    %c1_49 = arith.constant 1 : index
    %c0_50 = arith.constant 0 : index
    %c0_51 = arith.constant 0 : index
    %80 = vector.load %arg10[%c1_49, %c0_50, %c0_51] : memref<4x8x1xf32, #tpu.memory_space<vmem>>, vector<1x8x1xf32>
    %81 = vector.shape_cast %80 : vector<1x8x1xf32> to vector<8x1xf32>
    %82 = vector.shape_cast %58 : vector<8x1xf32> to vector<1x8x1xf32>
    tpu.vector_store %arg10[%c1_49, %c0_50, %c0_51], %82 {strides = array<i32>} : memref<4x8x1xf32, #tpu.memory_space<vmem>>, vector<1x8x1xf32>,
    %c0_52 = arith.constant 0 : index
    %c64 = arith.constant 64 : index
    %83 = vector.load %arg9[%c0_52, %c64] : memref<8x128xbf16, #tpu.memory_space<vmem>>, vector<8x32xbf16>
    %84 = vector.extract_strided_slice %4 {offsets = [0, 64], sizes = [8, 32], strides = [1, 1]} : vector<8x128xbf16> to vector<8x32xbf16>
    %85 = vector.extract_strided_slice %6 {offsets = [0, 64], sizes = [8, 32], strides = [1, 1]} : vector<8x128xbf16> to vector<8x32xbf16>
    %cst_53 = arith.constant dense<0.000000e+00> : vector<8x8xf32>
    %86 = tpu.matmul %83, %84, %cst_53 {dimension_numbers = #tpu.dot_dimension_numbers<[1], [1], [0], [0], [0, 0, 1, 0], [], []>} : vector<8x32xbf16>, vector<8x32xbf16>, vector<8x8xf32> -> vector<8x8xf32>
    %87 = vector.broadcast %12 : vector<1x8xf32> to vector<8x8xf32>
    %88 = arith.addf %86, %87 : vector<8x8xf32>
    %c2 = arith.constant 2 : index
    %c0_54 = arith.constant 0 : index
    %c0_55 = arith.constant 0 : index
    %89 = vector.load %arg10[%c2, %c0_54, %c0_55] : memref<4x8x1xf32, #tpu.memory_space<vmem>>, vector<1x8x1xf32>
    %90 = vector.shape_cast %89 : vector<1x8x1xf32> to vector<8x1xf32>
    %cst_56 = arith.constant dense<0xFF800000> : vector<8xf32>
    %91 = vector.multi_reduction <maximumf>, %88, %cst_56 [1] : vector<8x8xf32> to vector<8xf32>
    %92 = vector.shape_cast %91 : vector<8xf32> to vector<8x1xf32>
    %93 = arith.maximumf %90, %92 : vector<8x1xf32>
    %94 = arith.subf %90, %93 : vector<8x1xf32>
    %95 = math.exp %94 : vector<8x1xf32>
    %96 = vector.broadcast %93 : vector<8x1xf32> to vector<8x8xf32>
    %97 = arith.subf %88, %96 : vector<8x8xf32>
    %98 = math.exp %97 : vector<8x8xf32>
    %c2_57 = arith.constant 2 : index
    %c0_58 = arith.constant 0 : index
    %c0_59 = arith.constant 0 : index
    %99 = vector.load %arg11[%c2_57, %c0_58, %c0_59] : memref<4x8x1xf32, #tpu.memory_space<vmem>>, vector<1x8x1xf32>
    %100 = vector.shape_cast %99 : vector<1x8x1xf32> to vector<8x1xf32>
    %101 = arith.mulf %95, %100 : vector<8x1xf32>
    %cst_60 = arith.constant dense<0.000000e+00> : vector<8xf32>
    %102 = vector.multi_reduction <add>, %98, %cst_60 [1] : vector<8x8xf32> to vector<8xf32>
    %103 = vector.shape_cast %102 : vector<8xf32> to vector<8x1xf32>
    %104 = arith.addf %101, %103 : vector<8x1xf32>
    %c2_61 = arith.constant 2 : index
    %c0_62 = arith.constant 0 : index
    %c0_63 = arith.constant 0 : index
    %105 = vector.load %arg11[%c2_61, %c0_62, %c0_63] : memref<4x8x1xf32, #tpu.memory_space<vmem>>, vector<1x8x1xf32>
    %106 = vector.shape_cast %105 : vector<1x8x1xf32> to vector<8x1xf32>
    %107 = vector.shape_cast %104 : vector<8x1xf32> to vector<1x8x1xf32>
    tpu.vector_store %arg11[%c2_61, %c0_62, %c0_63], %107 {strides = array<i32>} : memref<4x8x1xf32, #tpu.memory_space<vmem>>, vector<1x8x1xf32>,
    %c0_64 = arith.constant 0 : index
    %c64_65 = arith.constant 64 : index
    %108 = vector.load %arg12[%c0_64, %c64_65] : memref<8x128xf32, #tpu.memory_space<vmem>>, vector<8x32xf32>
    %109 = vector.broadcast %95 : vector<8x1xf32> to vector<8x32xf32>
    %110 = arith.mulf %109, %108 : vector<8x32xf32>
    %111 = arith.truncf %98 : vector<8x8xf32> to vector<8x8xbf16>
    %cst_66 = arith.constant dense<0.000000e+00> : vector<8x32xf32>
    %112 = tpu.matmul %111, %85, %cst_66 {dimension_numbers = #tpu.dot_dimension_numbers<[1], [0], [0], [1], [0, 0, 1, 1], [], []>} : vector<8x8xbf16>, vector<8x32xbf16>, vector<8x32xf32> -> vector<8x32xf32>
    %113 = arith.addf %110, %112 : vector<8x32xf32>
    %c0_67 = arith.constant 0 : index
    %c64_68 = arith.constant 64 : index
    %114 = vector.load %arg12[%c0_67, %c64_68] : memref<8x128xf32, #tpu.memory_space<vmem>>, vector<8x32xf32>
    tpu.vector_store %arg12[%c0_67, %c64_68], %113 {strides = array<i32>} : memref<8x128xf32, #tpu.memory_space<vmem>>, vector<8x32xf32>,
    %c2_69 = arith.constant 2 : index
    %c0_70 = arith.constant 0 : index
    %c0_71 = arith.constant 0 : index
    %115 = vector.load %arg10[%c2_69, %c0_70, %c0_71] : memref<4x8x1xf32, #tpu.memory_space<vmem>>, vector<1x8x1xf32>
    %116 = vector.shape_cast %115 : vector<1x8x1xf32> to vector<8x1xf32>
    %117 = vector.shape_cast %93 : vector<8x1xf32> to vector<1x8x1xf32>
    tpu.vector_store %arg10[%c2_69, %c0_70, %c0_71], %117 {strides = array<i32>} : memref<4x8x1xf32, #tpu.memory_space<vmem>>, vector<1x8x1xf32>,
    %c0_72 = arith.constant 0 : index
    %c96 = arith.constant 96 : index
    %118 = vector.load %arg9[%c0_72, %c96] : memref<8x128xbf16, #tpu.memory_space<vmem>>, vector<8x32xbf16>
    %119 = vector.extract_strided_slice %4 {offsets = [0, 96], sizes = [8, 32], strides = [1, 1]} : vector<8x128xbf16> to vector<8x32xbf16>
    %120 = vector.extract_strided_slice %6 {offsets = [0, 96], sizes = [8, 32], strides = [1, 1]} : vector<8x128xbf16> to vector<8x32xbf16>
    %cst_73 = arith.constant dense<0.000000e+00> : vector<8x8xf32>
    %121 = tpu.matmul %118, %119, %cst_73 {dimension_numbers = #tpu.dot_dimension_numbers<[1], [1], [0], [0], [0, 0, 1, 0], [], []>} : vector<8x32xbf16>, vector<8x32xbf16>, vector<8x8xf32> -> vector<8x8xf32>
    %122 = vector.broadcast %12 : vector<1x8xf32> to vector<8x8xf32>
    %123 = arith.addf %121, %122 : vector<8x8xf32>
    %c3 = arith.constant 3 : index
    %c0_74 = arith.constant 0 : index
    %c0_75 = arith.constant 0 : index
    %124 = vector.load %arg10[%c3, %c0_74, %c0_75] : memref<4x8x1xf32, #tpu.memory_space<vmem>>, vector<1x8x1xf32>
    %125 = vector.shape_cast %124 : vector<1x8x1xf32> to vector<8x1xf32>
    %cst_76 = arith.constant dense<0xFF800000> : vector<8xf32>
    %126 = vector.multi_reduction <maximumf>, %123, %cst_76 [1] : vector<8x8xf32> to vector<8xf32>
    %127 = vector.shape_cast %126 : vector<8xf32> to vector<8x1xf32>
    %128 = arith.maximumf %125, %127 : vector<8x1xf32>
    %129 = arith.subf %125, %128 : vector<8x1xf32>
    %130 = math.exp %129 : vector<8x1xf32>
    %131 = vector.broadcast %128 : vector<8x1xf32> to vector<8x8xf32>
    %132 = arith.subf %123, %131 : vector<8x8xf32>
    %133 = math.exp %132 : vector<8x8xf32>
    %c3_77 = arith.constant 3 : index
    %c0_78 = arith.constant 0 : index
    %c0_79 = arith.constant 0 : index
    %134 = vector.load %arg11[%c3_77, %c0_78, %c0_79] : memref<4x8x1xf32, #tpu.memory_space<vmem>>, vector<1x8x1xf32>
    %135 = vector.shape_cast %134 : vector<1x8x1xf32> to vector<8x1xf32>
    %136 = arith.mulf %130, %135 : vector<8x1xf32>
    %cst_80 = arith.constant dense<0.000000e+00> : vector<8xf32>
    %137 = vector.multi_reduction <add>, %133, %cst_80 [1] : vector<8x8xf32> to vector<8xf32>
    %138 = vector.shape_cast %137 : vector<8xf32> to vector<8x1xf32>
    %139 = arith.addf %136, %138 : vector<8x1xf32>
    %c3_81 = arith.constant 3 : index
    %c0_82 = arith.constant 0 : index
    %c0_83 = arith.constant 0 : index
    %140 = vector.load %arg11[%c3_81, %c0_82, %c0_83] : memref<4x8x1xf32, #tpu.memory_space<vmem>>, vector<1x8x1xf32>
    %141 = vector.shape_cast %140 : vector<1x8x1xf32> to vector<8x1xf32>
    %142 = vector.shape_cast %139 : vector<8x1xf32> to vector<1x8x1xf32>
    tpu.vector_store %arg11[%c3_81, %c0_82, %c0_83], %142 {strides = array<i32>} : memref<4x8x1xf32, #tpu.memory_space<vmem>>, vector<1x8x1xf32>,
    %c0_84 = arith.constant 0 : index
    %c96_85 = arith.constant 96 : index
    %143 = vector.load %arg12[%c0_84, %c96_85] : memref<8x128xf32, #tpu.memory_space<vmem>>, vector<8x32xf32>
    %144 = vector.broadcast %130 : vector<8x1xf32> to vector<8x32xf32>
    %145 = arith.mulf %144, %143 : vector<8x32xf32>
    %146 = arith.truncf %133 : vector<8x8xf32> to vector<8x8xbf16>
    %cst_86 = arith.constant dense<0.000000e+00> : vector<8x32xf32>
    %147 = tpu.matmul %146, %120, %cst_86 {dimension_numbers = #tpu.dot_dimension_numbers<[1], [0], [0], [1], [0, 0, 1, 1], [], []>} : vector<8x8xbf16>, vector<8x32xbf16>, vector<8x32xf32> -> vector<8x32xf32>
    %148 = arith.addf %145, %147 : vector<8x32xf32>
    %c0_87 = arith.constant 0 : index
    %c96_88 = arith.constant 96 : index
    %149 = vector.load %arg12[%c0_87, %c96_88] : memref<8x128xf32, #tpu.memory_space<vmem>>, vector<8x32xf32>
    tpu.vector_store %arg12[%c0_87, %c96_88], %148 {strides = array<i32>} : memref<8x128xf32, #tpu.memory_space<vmem>>, vector<8x32xf32>,
    %c3_89 = arith.constant 3 : index
    %c0_90 = arith.constant 0 : index
    %c0_91 = arith.constant 0 : index
    %150 = vector.load %arg10[%c3_89, %c0_90, %c0_91] : memref<4x8x1xf32, #tpu.memory_space<vmem>>, vector<1x8x1xf32>
    %151 = vector.shape_cast %150 : vector<1x8x1xf32> to vector<8x1xf32>
    %152 = vector.shape_cast %128 : vector<8x1xf32> to vector<1x8x1xf32>
    tpu.vector_store %arg10[%c3_89, %c0_90, %c0_91], %152 {strides = array<i32>} : memref<4x8x1xf32, #tpu.memory_space<vmem>>, vector<1x8x1xf32>,
    %c0_i32_92 = arith.constant 0 : i32
    %153 = arith.cmpi eq, %arg2, %c0_i32_92 : i32
    %154 = arith.extui %153 : i1 to i32
    %c0_i32_93 = arith.constant 0 : i32
    %155 = arith.cmpi ne, %154, %c0_i32_93 : i32
    scf.if %155 {
      %c0_94 = arith.constant 0 : index
      %c0_95 = arith.constant 0 : index
      %c0_96 = arith.constant 0 : index
      %156 = vector.load %arg6[%c0_94, %c0_95, %c0_96] : memref<1x8x1xf32, #tpu.memory_space<vmem>>, vector<1x8x1xf32>
      %157 = vector.shape_cast %156 : vector<1x8x1xf32> to vector<8x1xf32>
      %cst_97 = arith.constant 0.000000e+00 : f32
      %158 = vector.broadcast %cst_97 : f32 to vector<8x1xf32>
      %159 = arith.cmpf ogt, %157, %158 : vector<8x1xf32>
      %c0_98 = arith.constant 0 : index
      %c0_99 = arith.constant 0 : index
      %c0_100 = arith.constant 0 : index
      %160 = vector.load %arg11[%c0_98, %c0_99, %c0_100] : memref<4x8x1xf32, #tpu.memory_space<vmem>>, vector<1x8x1xf32>
      %161 = vector.shape_cast %160 : vector<1x8x1xf32> to vector<8x1xf32>
      %162 = tpu.reciprocal %161 {approx = true} : vector<8x1xf32> -> vector<8x1xf32>
      %c0_101 = arith.constant 0 : index
      %c0_102 = arith.constant 0 : index
      %163 = vector.load %arg12[%c0_101, %c0_102] : memref<8x128xf32, #tpu.memory_space<vmem>>, vector<8x32xf32>
      %164 = vector.broadcast %162 : vector<8x1xf32> to vector<8x32xf32>
      %165 = arith.mulf %163, %164 : vector<8x32xf32>
      %c0_103 = arith.constant 0 : index
      %c0_104 = arith.constant 0 : index
      %c0_105 = arith.constant 0 : index
      %166 = vector.load %arg10[%c0_103, %c0_104, %c0_105] : memref<4x8x1xf32, #tpu.memory_space<vmem>>, vector<1x8x1xf32>
      %167 = vector.shape_cast %166 : vector<1x8x1xf32> to vector<8x1xf32>
      %cst_106 = arith.constant -1.000000e+29 : f32
      %168 = vector.broadcast %cst_106 : f32 to vector<8x1xf32>
      %169 = arith.cmpf ogt, %167, %168 : vector<8x1xf32>
      %170 = arith.andi %169, %159 : vector<8x1xi1>
      %cst_107 = arith.constant 0.000000e+00 : f32
      %171 = vector.shape_cast %170 : vector<8x1xi1> to vector<8x1xi1>
      %172 = vector.broadcast %171 : vector<8x1xi1> to vector<8x32xi1>
      %173 = vector.broadcast %cst_107 : f32 to vector<8x32xf32>
      %174 = arith.select %172, %165, %173 : vector<8x32xi1>, vector<8x32xf32>
      %c1_108 = arith.constant 1 : index
      %c0_109 = arith.constant 0 : index
      %c0_110 = arith.constant 0 : index
      %175 = vector.load %arg11[%c1_108, %c0_109, %c0_110] : memref<4x8x1xf32, #tpu.memory_space<vmem>>, vector<1x8x1xf32>
      %176 = vector.shape_cast %175 : vector<1x8x1xf32> to vector<8x1xf32>
      %177 = tpu.reciprocal %176 {approx = true} : vector<8x1xf32> -> vector<8x1xf32>
      %c0_111 = arith.constant 0 : index
      %c32_112 = arith.constant 32 : index
      %178 = vector.load %arg12[%c0_111, %c32_112] : memref<8x128xf32, #tpu.memory_space<vmem>>, vector<8x32xf32>
      %179 = vector.broadcast %177 : vector<8x1xf32> to vector<8x32xf32>
      %180 = arith.mulf %178, %179 : vector<8x32xf32>
      %c1_113 = arith.constant 1 : index
      %c0_114 = arith.constant 0 : index
      %c0_115 = arith.constant 0 : index
      %181 = vector.load %arg10[%c1_113, %c0_114, %c0_115] : memref<4x8x1xf32, #tpu.memory_space<vmem>>, vector<1x8x1xf32>
      %182 = vector.shape_cast %181 : vector<1x8x1xf32> to vector<8x1xf32>
      %cst_116 = arith.constant -1.000000e+29 : f32
      %183 = vector.broadcast %cst_116 : f32 to vector<8x1xf32>
      %184 = arith.cmpf ogt, %182, %183 : vector<8x1xf32>
      %185 = arith.andi %184, %159 : vector<8x1xi1>
      %cst_117 = arith.constant 0.000000e+00 : f32
      %186 = vector.shape_cast %185 : vector<8x1xi1> to vector<8x1xi1>
      %187 = vector.broadcast %186 : vector<8x1xi1> to vector<8x32xi1>
      %188 = vector.broadcast %cst_117 : f32 to vector<8x32xf32>
      %189 = arith.select %187, %180, %188 : vector<8x32xi1>, vector<8x32xf32>
      %c2_118 = arith.constant 2 : index
      %c0_119 = arith.constant 0 : index
      %c0_120 = arith.constant 0 : index
      %190 = vector.load %arg11[%c2_118, %c0_119, %c0_120] : memref<4x8x1xf32, #tpu.memory_space<vmem>>, vector<1x8x1xf32>
      %191 = vector.shape_cast %190 : vector<1x8x1xf32> to vector<8x1xf32>
      %192 = tpu.reciprocal %191 {approx = true} : vector<8x1xf32> -> vector<8x1xf32>
      %c0_121 = arith.constant 0 : index
      %c64_122 = arith.constant 64 : index
      %193 = vector.load %arg12[%c0_121, %c64_122] : memref<8x128xf32, #tpu.memory_space<vmem>>, vector<8x32xf32>
      %194 = vector.broadcast %192 : vector<8x1xf32> to vector<8x32xf32>
      %195 = arith.mulf %193, %194 : vector<8x32xf32>
      %c2_123 = arith.constant 2 : index
      %c0_124 = arith.constant 0 : index
      %c0_125 = arith.constant 0 : index
      %196 = vector.load %arg10[%c2_123, %c0_124, %c0_125] : memref<4x8x1xf32, #tpu.memory_space<vmem>>, vector<1x8x1xf32>
      %197 = vector.shape_cast %196 : vector<1x8x1xf32> to vector<8x1xf32>
      %cst_126 = arith.constant -1.000000e+29 : f32
      %198 = vector.broadcast %cst_126 : f32 to vector<8x1xf32>
      %199 = arith.cmpf ogt, %197, %198 : vector<8x1xf32>
      %200 = arith.andi %199, %159 : vector<8x1xi1>
      %cst_127 = arith.constant 0.000000e+00 : f32
      %201 = vector.shape_cast %200 : vector<8x1xi1> to vector<8x1xi1>
      %202 = vector.broadcast %201 : vector<8x1xi1> to vector<8x32xi1>
      %203 = vector.broadcast %cst_127 : f32 to vector<8x32xf32>
      %204 = arith.select %202, %195, %203 : vector<8x32xi1>, vector<8x32xf32>
      %c3_128 = arith.constant 3 : index
      %c0_129 = arith.constant 0 : index
      %c0_130 = arith.constant 0 : index
      %205 = vector.load %arg11[%c3_128, %c0_129, %c0_130] : memref<4x8x1xf32, #tpu.memory_space<vmem>>, vector<1x8x1xf32>
      %206 = vector.shape_cast %205 : vector<1x8x1xf32> to vector<8x1xf32>
      %207 = tpu.reciprocal %206 {approx = true} : vector<8x1xf32> -> vector<8x1xf32>
      %c0_131 = arith.constant 0 : index
      %c96_132 = arith.constant 96 : index
      %208 = vector.load %arg12[%c0_131, %c96_132] : memref<8x128xf32, #tpu.memory_space<vmem>>, vector<8x32xf32>
      %209 = vector.broadcast %207 : vector<8x1xf32> to vector<8x32xf32>
      %210 = arith.mulf %208, %209 : vector<8x32xf32>
      %c3_133 = arith.constant 3 : index
      %c0_134 = arith.constant 0 : index
      %c0_135 = arith.constant 0 : index
      %211 = vector.load %arg10[%c3_133, %c0_134, %c0_135] : memref<4x8x1xf32, #tpu.memory_space<vmem>>, vector<1x8x1xf32>
      %212 = vector.shape_cast %211 : vector<1x8x1xf32> to vector<8x1xf32>
      %cst_136 = arith.constant -1.000000e+29 : f32
      %213 = vector.broadcast %cst_136 : f32 to vector<8x1xf32>
      %214 = arith.cmpf ogt, %212, %213 : vector<8x1xf32>
      %215 = arith.andi %214, %159 : vector<8x1xi1>
      %cst_137 = arith.constant 0.000000e+00 : f32
      %216 = vector.shape_cast %215 : vector<8x1xi1> to vector<8x1xi1>
      %217 = vector.broadcast %216 : vector<8x1xi1> to vector<8x32xi1>
      %218 = vector.broadcast %cst_137 : f32 to vector<8x32xf32>
      %219 = arith.select %217, %210, %218 : vector<8x32xi1>, vector<8x32xf32>
      %220 = tpu.concatenate %174, %189, %204, %219 in 1 : vector<8x32xf32>, vector<8x32xf32>, vector<8x32xf32>, vector<8x32xf32> -> vector<8x128xf32>
      %c0_138 = arith.constant 0 : index
      %c0_139 = arith.constant 0 : index
      %c0_140 = arith.constant 0 : index
      %221 = vector.load %arg8[%c0_138, %c0_139, %c0_140] : memref<1x8x128xf32, #tpu.memory_space<vmem>>, vector<1x8x128xf32>
      %222 = vector.shape_cast %221 : vector<1x8x128xf32> to vector<8x128xf32>
      %223 = vector.shape_cast %220 : vector<8x128xf32> to vector<1x8x128xf32>
      tpu.vector_store %arg8[%c0_138, %c0_139, %c0_140], %223 {strides = array<i32>} : memref<1x8x128xf32, #tpu.memory_space<vmem>>, vector<1x8x128xf32>,
    } else {
    }
    return
  }
  func.func @transform_0(%arg0: i32, %arg1: i32, %arg2: i32) -> (i32, i32, i32) {
    %c0_i32 = arith.constant 0 : i32
    %c0_i32_0 = arith.constant 0 : i32
    return %arg0, %arg1, %c0_i32 : i32, i32, i32
  }
  func.func @transform_1(%arg0: i32, %arg1: i32, %arg2: i32) -> (i32, i32, i32) {
    %c0_i32 = arith.constant 0 : i32
    %c0_i32_0 = arith.constant 0 : i32
    return %arg0, %arg2, %c0_i32 : i32, i32, i32
  }
  func.func @transform_2(%arg0: i32, %arg1: i32, %arg2: i32) -> (i32, i32, i32) {
    %c0_i32 = arith.constant 0 : i32
    %c0_i32_0 = arith.constant 0 : i32
    return %arg0, %arg2, %c0_i32 : i32, i32, i32
  }
  func.func @transform_3(%arg0: i32, %arg1: i32, %arg2: i32) -> (i32, i32, i32) {
    %c0_i32 = arith.constant 0 : i32
    %c0_i32_0 = arith.constant 0 : i32
    return %arg0, %arg1, %c0_i32 : i32, i32, i32
  }
  func.func @transform_4(%arg0: i32, %arg1: i32, %arg2: i32) -> (i32, i32, i32) {
    %c0_i32 = arith.constant 0 : i32
    %c0_i32_0 = arith.constant 0 : i32
    return %arg0, %c0_i32, %arg2 : i32, i32, i32
  }
  func.func @transform_5(%arg0: i32, %arg1: i32, %arg2: i32) -> (i32, i32, i32) {
    %c0_i32 = arith.constant 0 : i32
    %c0_i32_0 = arith.constant 0 : i32
    return %arg0, %arg1, %c0_i32 : i32, i32, i32
  }
}

</mosaic_0001>

<llo_original>
// kernel: full_attention.1
$region0: #{full_attention.1}
  #allocation0 [shape = 'u32[]', space=smem, size = 0x4, offset = 0x4, fixed_abs, tag = 'smem constant byte address 0x4 - core index']
  #allocation1 [shape = 'u32[144,128]{1,0:T(1,128)}', space=vmem, size = 0x12000, scoped, tag = 'internal scratch']
  #allocation2 [shape = 'bf16[8,128]{1,0:T(8,128)(2,1)}', space=vmem, size = 0x800, scoped, tag = 'scratch operand']
  #allocation3 [shape = 'f32[4,8,1]{2,1,0:T(8,128)}', space=vmem, size = 0x4000, scoped, tag = 'scratch operand']
  #allocation4 [shape = 'f32[4,8,1]{2,1,0:T(8,128)}', space=vmem, size = 0x4000, scoped, tag = 'scratch operand']
  #allocation5 [shape = 'f32[8,128]{1,0:T(8,128)}', space=vmem, size = 0x1000, scoped, tag = 'scratch operand']
  %s0 = inlined_call_operand.vmem [shape: bf16[2,8,128], index: 0, kind: input, shape index: {}]
  %s1 = inlined_call_operand.vmem [shape: bf16[2,8,128], index: 1, kind: input, shape index: {}]
  %s2 = inlined_call_operand.vmem [shape: bf16[2,8,128], index: 2, kind: input, shape index: {}]
  %s3 = inlined_call_operand.vmem [shape: f32[2,8,1], index: 3, kind: input, shape index: {}]
  %s4 = inlined_call_operand.vmem [shape: f32[2,1,8], index: 4, kind: input, shape index: {}]
  %s5 = inlined_call_operand.vmem [shape: f32[2,8,128], index: 5, kind: output, shape index: {}]
  %s6 = sld [smem:[#allocation0]]
  $region61: #{full_attention.1} parent=0
    _
  %s8 = ssub.s32 1, %s6
  %s9 = scalar_select 0, %s8, %s6
  loop: start=0, step=1, limit=4
  $region2: #{full_attention.1} parent=0 // loop_pre_header
    _
  $region3: #{full_attention.1} parent=0 // loop_header
    %s11 = sphi 0, %s15
    %p12 = scmp.ge.s32.totalorder %s11, 4
    %s18 = sphi 0, %s37
    %s19 = sphi 0, %s33
    %s20 = sphi 0, %s29
    %s21 = sphi 0, %s18
    %s22 = sphi 0, %s19
    %s23 = sphi 0, %s20
    %s24 = sphi 0, %s21
    %s25 = sphi 0, %s22
    %s26 = sphi 0, %s23
    %s42 = sphi 0, %s44
    %s45 = sphi 0, %s42
    %s46 = sphi 0, %s45
    %s62 = sphi 0, %s46
    %s70 = sphi 0, %s72
    %s73 = sphi 0, %s70
    %s74 = sphi 0, %s73
    %s90 = sphi 0, %s74
    %s98 = sphi 0, %s100
    %s101 = sphi 0, %s98
    %s102 = sphi 0, %s101
    %s118 = sphi 0, %s102
    %s126 = sphi 0, %s128
    %s129 = sphi 0, %s126
    %s130 = sphi 0, %s129
    %s146 = sphi 0, %s130
    %s154 = sphi 0, %s156
    %s157 = sphi 0, %s154
    %s158 = sphi 0, %s157
    %s174 = sphi 0, %s158
    %s182 = sphi 0, %s184
    %s185 = sphi 0, %s182
    %s186 = sphi 0, %s185
    %s202 = sphi 0, %s186
  $region4: #{full_attention.1} parent=0 // loop_header_branch
    %14 = sbr.rel (%p12) target = $region8
  $region5: #{full_attention.1} parent=0 // loop_body
    %s16 = ssub.s32 %s11, 1
    %s17 = ssub.s32 %s11, 2
    %s27 = sadd.s32 1, %s20
    %p28 = scmp.ge.s32.totalorder %s27, 1
    %s29 = scalar_select %p28, 0, %s27
    %s30 = sadd.s32 1, %s19
    %s31 = scalar_select %p28, %s30, %s19
    %p32 = scmp.ge.s32.totalorder %s31, 1
    %s33 = scalar_select %p32, 0, %s31
    %s34 = sadd.s32 1, %s18
    %s35 = scalar_select %p32, %s34, %s18
    %p36 = scmp.ge.s32.totalorder %s35, 2
    %s37 = scalar_select %p36, 0, %s35
    %s38 = ssub.s32 %s18, %s37
    %s39 = ssub.s32 %s19, %s33
    %s40 = sor.u32 %s38, %s39
    %p41 = scmp.eq.s32.totalorder %s40, 0
    %s43 = sadd.s32 %s42, 1
    %s44 = scalar_select %p41, %s42, %s43
    %p47 = pneg %p41
    %p48 = scmp.eq.s32.totalorder %s11, 1
    %p49 = por %p47, %p48
    %p50 = scmp.ne.s32.totalorder %s42, %s45
    %p51 = scmp.eq.s32.totalorder %s11, 0
    %p52 = por %p50, %p51
    %p53 = scmp.ne.s32.totalorder %s42, %s45
    %p54 = scmp.eq.s32.totalorder %s16, 1
    %p55 = por %p53, %p54
    %p56 = scmp.ne.s32.totalorder %s45, %s46
    %p57 = scmp.eq.s32.totalorder %s16, 0
    %p58 = por %p56, %p57
    %p59 = scmp.ne.s32.totalorder %s45, %s46
    %p60 = scmp.eq.s32.totalorder %s17, 1
    %p61 = por %p59, %p60
    %p63 = scmp.ne.s32.totalorder %s46, %s62
    %p64 = scmp.eq.s32.totalorder %s17, 0
    %p65 = por %p63, %p64
    %s66 = ssub.s32 %s18, %s37
    %s67 = ssub.s32 %s20, %s29
    %s68 = sor.u32 %s66, %s67
    %p69 = scmp.eq.s32.totalorder %s68, 0
    %s71 = sadd.s32 %s70, 1
    %s72 = scalar_select %p69, %s70, %s71
    %p75 = pneg %p69
    %p76 = scmp.eq.s32.totalorder %s11, 1
    %p77 = por %p75, %p76
    %p78 = scmp.ne.s32.totalorder %s70, %s73
    %p79 = scmp.eq.s32.totalorder %s11, 0
    %p80 = por %p78, %p79
    %p81 = scmp.ne.s32.totalorder %s70, %s73
    %p82 = scmp.eq.s32.totalorder %s16, 1
    %p83 = por %p81, %p82
    %p84 = scmp.ne.s32.totalorder %s73, %s74
    %p85 = scmp.eq.s32.totalorder %s16, 0
    %p86 = por %p84, %p85
    %p87 = scmp.ne.s32.totalorder %s73, %s74
    %p88 = scmp.eq.s32.totalorder %s17, 1
    %p89 = por %p87, %p88
    %p91 = scmp.ne.s32.totalorder %s74, %s90
    %p92 = scmp.eq.s32.totalorder %s17, 0
    %p93 = por %p91, %p92
    %s94 = ssub.s32 %s18, %s37
    %s95 = ssub.s32 %s20, %s29
    %s96 = sor.u32 %s94, %s95
    %p97 = scmp.eq.s32.totalorder %s96, 0
    %s99 = sadd.s32 %s98, 1
    %s100 = scalar_select %p97, %s98, %s99
    %p103 = pneg %p97
    %p104 = scmp.eq.s32.totalorder %s11, 1
    %p105 = por %p103, %p104
    %p106 = scmp.ne.s32.totalorder %s98, %s101
    %p107 = scmp.eq.s32.totalorder %s11, 0
    %p108 = por %p106, %p107
    %p109 = scmp.ne.s32.totalorder %s98, %s101
    %p110 = scmp.eq.s32.totalorder %s16, 1
    %p111 = por %p109, %p110
    %p112 = scmp.ne.s32.totalorder %s101, %s102
    %p113 = scmp.eq.s32.totalorder %s16, 0
    %p114 = por %p112, %p113
    %p115 = scmp.ne.s32.totalorder %s101, %s102
    %p116 = scmp.eq.s32.totalorder %s17, 1
    %p117 = por %p115, %p116
    %p119 = scmp.ne.s32.totalorder %s102, %s118
    %p120 = scmp.eq.s32.totalorder %s17, 0
    %p121 = por %p119, %p120
    %s122 = ssub.s32 %s18, %s37
    %s123 = ssub.s32 %s19, %s33
    %s124 = sor.u32 %s122, %s123
    %p125 = scmp.eq.s32.totalorder %s124, 0
    %s127 = sadd.s32 %s126, 1
    %s128 = scalar_select %p125, %s126, %s127
    %p131 = pneg %p125
    %p132 = scmp.eq.s32.totalorder %s11, 1
    %p133 = por %p131, %p132
    %p134 = scmp.ne.s32.totalorder %s126, %s129
    %p135 = scmp.eq.s32.totalorder %s11, 0
    %p136 = por %p134, %p135
    %p137 = scmp.ne.s32.totalorder %s126, %s129
    %p138 = scmp.eq.s32.totalorder %s16, 1
    %p139 = por %p137, %p138
    %p140 = scmp.ne.s32.totalorder %s129, %s130
    %p141 = scmp.eq.s32.totalorder %s16, 0
    %p142 = por %p140, %p141
    %p143 = scmp.ne.s32.totalorder %s129, %s130
    %p144 = scmp.eq.s32.totalorder %s17, 1
    %p145 = por %p143, %p144
    %p147 = scmp.ne.s32.totalorder %s130, %s146
    %p148 = scmp.eq.s32.totalorder %s17, 0
    %p149 = por %p147, %p148
    %s150 = ssub.s32 %s18, %s37
    %s151 = ssub.s32 %s20, %s29
    %s152 = sor.u32 %s150, %s151
    %p153 = scmp.eq.s32.totalorder %s152, 0
    %s155 = sadd.s32 %s154, 1
    %s156 = scalar_select %p153, %s154, %s155
    %p159 = pneg %p153
    %p160 = scmp.eq.s32.totalorder %s11, 1
    %p161 = por %p159, %p160
    %p162 = scmp.ne.s32.totalorder %s154, %s157
    %p163 = scmp.eq.s32.totalorder %s11, 0
    %p164 = por %p162, %p163
    %p165 = scmp.ne.s32.totalorder %s154, %s157
    %p166 = scmp.eq.s32.totalorder %s16, 1
    %p167 = por %p165, %p166
    %p168 = scmp.ne.s32.totalorder %s157, %s158
    %p169 = scmp.eq.s32.totalorder %s16, 0
    %p170 = por %p168, %p169
    %p171 = scmp.ne.s32.totalorder %s157, %s158
    %p172 = scmp.eq.s32.totalorder %s17, 1
    %p173 = por %p171, %p172
    %p175 = scmp.ne.s32.totalorder %s158, %s174
    %p176 = scmp.eq.s32.totalorder %s17, 0
    %p177 = por %p175, %p176
    %s178 = ssub.s32 %s18, %s37
    %s179 = ssub.s32 %s19, %s33
    %s180 = sor.u32 %s178, %s179
    %p181 = scmp.eq.s32.totalorder %s180, 0
    %s183 = sadd.s32 %s182, 1
    %s184 = scalar_select %p181, %s182, %s183
    %p187 = pneg %p181
    %p188 = scmp.eq.s32.totalorder %s11, 1
    %p189 = por %p187, %p188
    %p190 = scmp.ne.s32.totalorder %s182, %s185
    %p191 = scmp.eq.s32.totalorder %s11, 0
    %p192 = por %p190, %p191
    %p193 = scmp.ne.s32.totalorder %s182, %s185
    %p194 = scmp.eq.s32.totalorder %s16, 1
    %p195 = por %p193, %p194
    %p196 = scmp.ne.s32.totalorder %s185, %s186
    %p197 = scmp.eq.s32.totalorder %s16, 0
    %p198 = por %p196, %p197
    %p199 = scmp.ne.s32.totalorder %s185, %s186
    %p200 = scmp.eq.s32.totalorder %s17, 1
    %p201 = por %p199, %p200
    %p203 = scmp.ne.s32.totalorder %s186, %s202
    %p204 = scmp.eq.s32.totalorder %s17, 0
    %p205 = por %p203, %p204
    %p206 = scmp.le.s32.totalorder 1, %s11
    %p207 = scmp.lt.s32.totalorder %s11, 3
    %p208 = pnand %p206, %p207
    %p209 = pneg %p208
    // Predicated region
    $region9: #{full_attention.1} parent=5 // pred_check
      _
    $region10: #{full_attention.1} parent=5 // pred_check_branch
      %211 = sbr.rel (%p208) target = $region12
    $region11: #{full_attention.1} parent=5 // pred_region
      %s212 = ssub.s32 %s11, 1
    $region12: #{full_attention.1} parent=5 // pred_fallthru
      _
    %p213 = scmp.lt.s32.totalorder %s11, 2
    // Predicated region
    $region13: #{full_attention.1} parent=5 // pred_check
      %p214 = pneg %p213
    $region14: #{full_attention.1} parent=5 // pred_check_branch
      %216 = sbr.rel (%p214) target = $region16
    $region15: #{full_attention.1} parent=5 // pred_region
      // Predicated region
      $region17: #{full_attention.1} parent=15 // pred_check
        %p217 = pneg %p52
      $region18: #{full_attention.1} parent=15 // pred_check_branch
        %219 = sbr.rel (%p217) target = $region20
      $region19: #{full_attention.1} parent=15 // pred_region
        %p220 = scmp.lt.s32.totalorder %s18, 1
        %s221 = scalar_select %p220, %s18, 1
        %p222 = scmp.lt.s32.totalorder %s19, 0
        %s223 = scalar_select %p222, %s19, 0
        %s224 = sadd.s32 %s223, %s221
        %s225 = smul.addr %s224, 4
        %s226 = scalar_lea.vmem %s0, %s225
      $region20: #{full_attention.1} parent=15 // pred_fallthru
        _
      // Predicated region
      $region21: #{full_attention.1} parent=15 // pred_check
        %p227 = pneg %p80
      $region22: #{full_attention.1} parent=15 // pred_check_branch
        %229 = sbr.rel (%p227) target = $region24
      $region23: #{full_attention.1} parent=15 // pred_region
        %p230 = scmp.lt.s32.totalorder %s18, 1
        %s231 = scalar_select %p230, %s18, 1
        %p232 = scmp.lt.s32.totalorder %s20, 0
        %s233 = scalar_select %p232, %s20, 0
        %s234 = sadd.s32 %s233, %s231
        %s235 = smul.addr %s234, 4
        %s236 = scalar_lea.vmem %s1, %s235
      $region24: #{full_attention.1} parent=15 // pred_fallthru
        _
      // Predicated region
      $region25: #{full_attention.1} parent=15 // pred_check
        %p237 = pneg %p108
      $region26: #{full_attention.1} parent=15 // pred_check_branch
        %239 = sbr.rel (%p237) target = $region28
      $region27: #{full_attention.1} parent=15 // pred_region
        %p240 = scmp.lt.s32.totalorder %s18, 1
        %s241 = scalar_select %p240, %s18, 1
        %p242 = scmp.lt.s32.totalorder %s20, 0
        %s243 = scalar_select %p242, %s20, 0
        %s244 = sadd.s32 %s243, %s241
        %s245 = smul.addr %s244, 4
        %s246 = scalar_lea.vmem %s2, %s245
      $region28: #{full_attention.1} parent=15 // pred_fallthru
        _
      // Predicated region
      $region29: #{full_attention.1} parent=15 // pred_check
        %p247 = pneg %p136
      $region30: #{full_attention.1} parent=15 // pred_check_branch
        %249 = sbr.rel (%p247) target = $region32
      $region31: #{full_attention.1} parent=15 // pred_region
        %p250 = scmp.lt.s32.totalorder %s18, 1
        %s251 = scalar_select %p250, %s18, 1
        %p252 = scmp.lt.s32.totalorder %s19, 0
        %s253 = scalar_select %p252, %s19, 0
        %s254 = sadd.s32 %s253, %s251
        %s255 = smul.addr %s254, 8
        %s256 = scalar_lea.vmem %s3, %s255
      $region32: #{full_attention.1} parent=15 // pred_fallthru
        _
      // Predicated region
      $region33: #{full_attention.1} parent=15 // pred_check
        %p257 = pneg %p164
      $region34: #{full_attention.1} parent=15 // pred_check_branch
        %259 = sbr.rel (%p257) target = $region36
      $region35: #{full_attention.1} parent=15 // pred_region
        %p260 = scmp.lt.s32.totalorder %s18, 1
        %s261 = scalar_select %p260, %s18, 1
        %p262 = scmp.lt.s32.totalorder %s20, 0
        %s263 = scalar_select %p262, %s20, 0
        %s264 = sadd.s32 %s263, %s261
        %s265 = scalar_lea.vmem %s4, %s264
      $region36: #{full_attention.1} parent=15 // pred_fallthru
        _
    $region16: #{full_attention.1} parent=5 // pred_fallthru
      _
    %p266 = scmp.le.s32.totalorder 1, %s11
    %p267 = scmp.lt.s32.totalorder %s11, 3
    %p268 = pnand %p266, %p267
    %p269 = pneg %p268
    // Predicated region
    $region37: #{full_attention.1} parent=5 // pred_check
      _
    $region38: #{full_attention.1} parent=5 // pred_check_branch
      %271 = sbr.rel (%p268) target = $region40
    $region39: #{full_attention.1} parent=5 // pred_region
      %s272 = ssub.s32 %s11, 1
      %p273 = scmp.lt.s32.totalorder %s21, 1
      %s274 = scalar_select %p273, %s21, 1
      %p275 = scmp.lt.s32.totalorder %s22, 0
      %s276 = scalar_select %p275, %s22, 0
      %s277 = sadd.s32 %s276, %s274
      %s278 = smul.addr %s277, 4
      %s279 = scalar_lea.vmem %s0, %s278
      %p280 = pneg %p58
      %p281 = pneg %p55
      %p282 = scmp.lt.s32.totalorder %s21, 1
      %s283 = scalar_select %p282, %s21, 1
      %p284 = scmp.lt.s32.totalorder %s23, 0
      %s285 = scalar_select %p284, %s23, 0
      %s286 = sadd.s32 %s285, %s283
      %s287 = smul.addr %s286, 4
      %s288 = scalar_lea.vmem %s1, %s287
      %p289 = pneg %p86
      %p290 = pneg %p83
      %p291 = scmp.lt.s32.totalorder %s21, 1
      %s292 = scalar_select %p291, %s21, 1
      %p293 = scmp.lt.s32.totalorder %s23, 0
      %s294 = scalar_select %p293, %s23, 0
      %s295 = sadd.s32 %s294, %s292
      %s296 = smul.addr %s295, 4
      %s297 = scalar_lea.vmem %s2, %s296
      %p298 = pneg %p114
      %p299 = pneg %p111
      %p300 = scmp.lt.s32.totalorder %s21, 1
      %s301 = scalar_select %p300, %s21, 1
      %p302 = scmp.lt.s32.totalorder %s22, 0
      %s303 = scalar_select %p302, %s22, 0
      %s304 = sadd.s32 %s303, %s301
      %s305 = smul.addr %s304, 8
      %s306 = scalar_lea.vmem %s3, %s305
      %p307 = pneg %p142
      %p308 = pneg %p139
      %p309 = scmp.lt.s32.totalorder %s21, 1
      %s310 = scalar_select %p309, %s21, 1
      %p311 = scmp.lt.s32.totalorder %s23, 0
      %s312 = scalar_select %p311, %s23, 0
      %s313 = sadd.s32 %s312, %s310
      %s314 = scalar_lea.vmem %s4, %s313
      %p315 = pneg %p170
      %p316 = pneg %p167
      %p317 = pneg %p198
      %p318 = pneg %p195
      %p319 = scmp.lt.s32.totalorder %s21, 1
      %s320 = scalar_select %p319, %s21, 1
      %p321 = scmp.lt.s32.totalorder %s22, 0
      %s322 = scalar_select %p321, %s22, 0
      %s323 = sadd.s32 %s322, %s320
      %s324 = smul.addr %s323, 8
      %s325 = scalar_lea.vmem %s5, %s324
      %p326 = scmp.lt.s32.totalorder %s21, 1
      %s327 = scalar_select %p326, %s21, 1
      %p328 = scmp.lt.s32.totalorder %s22, 0
      %s329 = scalar_select %p328, %s22, 0
      %s330 = sadd.s32 %s329, %s327
      %s331 = smul.addr %s330, 4
      %s332 = scalar_lea.vmem %s0, %s331
      %p333 = scmp.lt.s32.totalorder %s21, 1
      %s334 = scalar_select %p333, %s21, 1
      %p335 = scmp.lt.s32.totalorder %s23, 0
      %s336 = scalar_select %p335, %s23, 0
      %s337 = sadd.s32 %s336, %s334
      %s338 = smul.addr %s337, 4
      %s339 = scalar_lea.vmem %s1, %s338
      %p340 = scmp.lt.s32.totalorder %s21, 1
      %s341 = scalar_select %p340, %s21, 1
      %p342 = scmp.lt.s32.totalorder %s23, 0
      %s343 = scalar_select %p342, %s23, 0
      %s344 = sadd.s32 %s343, %s341
      %s345 = smul.addr %s344, 4
      %s346 = scalar_lea.vmem %s2, %s345
      %p347 = scmp.lt.s32.totalorder %s21, 1
      %s348 = scalar_select %p347, %s21, 1
      %p349 = scmp.lt.s32.totalorder %s22, 0
      %s350 = scalar_select %p349, %s22, 0
      %s351 = sadd.s32 %s350, %s348
      %s352 = smul.addr %s351, 8
      %s353 = scalar_lea.vmem %s3, %s352
      %p354 = scmp.lt.s32.totalorder %s21, 1
      %s355 = scalar_select %p354, %s21, 1
      %p356 = scmp.lt.s32.totalorder %s23, 0
      %s357 = scalar_select %p356, %s23, 0
      %s358 = sadd.s32 %s357, %s355
      %s359 = scalar_lea.vmem %s4, %s358
      %p360 = scmp.lt.s32.totalorder %s21, 1
      %s361 = scalar_select %p360, %s21, 1
      %p362 = scmp.lt.s32.totalorder %s22, 0
      %s363 = scalar_select %p362, %s22, 0
      %s364 = sadd.s32 %s363, %s361
      %s365 = smul.addr %s364, 8
      %s366 = scalar_lea.vmem %s5, %s365
      %p368 = scmp.eq.s32.totalorder %s23, 0
      // Predicated region
      $region41: #{full_attention.1} parent=39 // pred_check
        %p369 = pneg %p368
      $region42: #{full_attention.1} parent=39 // pred_check_branch
        %371 = sbr.rel (%p369) target = $region44
      $region43: #{full_attention.1} parent=39 // pred_region
        %v372 = vld [vmem:[%s332] sm:$0xf]
        %v373 = vunpack.c.l.bf16 %v372
        %v374 = vmul.f32 %v373, 0.17677669
        %v375 = vpack.c.bf16 %v374, %v374
        %376 = vst [vmem:[#allocation2] sm:$0xf] %v375
        %vm377 = vcmask 7168
        %378 = vst.msk [vmem:[#allocation3] sm:$0xff] %vm377, -1e+37
        %379 = vst.msk [vmem:[#allocation3 + $0x8] sm:$0xff] %vm377, -1e+37
        %380 = vst.msk [vmem:[#allocation3 + $0x10] sm:$0xff] %vm377, -1e+37
        %381 = vst.msk [vmem:[#allocation3 + $0x18] sm:$0xff] %vm377, -1e+37
        %382 = vst.msk [vmem:[#allocation4] sm:$0xff] %vm377, 0.0
        %383 = vst.msk [vmem:[#allocation4 + $0x8] sm:$0xff] %vm377, 0.0
        %384 = vst.msk [vmem:[#allocation4 + $0x10] sm:$0xff] %vm377, 0.0
        %385 = vst.msk [vmem:[#allocation4 + $0x18] sm:$0xff] %vm377, 0.0
        %386 = vst [vmem:[#allocation5] sm:$0xff] 0.0
      $region44: #{full_attention.1} parent=39 // pred_fallthru
        _
      %v387 = vld [vmem:[%s339] sm:$0xf]
      %v388 = vld [vmem:[%s346] sm:$0xf]
      %v389 = vld [vmem:[%s359] sm:$0x1]
      %v390 = vsub.f32 %v389, 1.0
      %v391 = vmul.f32 %v390, 1e+30
      %v392 = vld [vmem:[#allocation2] sm:$0xf]
      %v394 = vlaneseq
      %v395 = vshrl.u32 %v394, 7
      %v396 = vsub.s32 0, %v395
      %v397 = vrot.slane %v391, %v396
      %vm399 = vcmask 261120
      %v401 = vsel %vm399, %v392, 0
      %v404 = vsel %vm399, %v387, 0
      %406 = vmatprep.subr.bf16.mxu0 0
      %407 = vmatpush1.bf16.xpose.msra.mxu0 0
      %408 = vmatprep.subr.bf16.mxu0 0
      %409 = vmatpush1.bf16.xpose.msra.mxu0 0
      %410 = vmatprep.subr.bf16.mxu0 0
      %411 = vmatpush1.bf16.xpose.msra.mxu0 0
      %412 = vmatprep.subr.bf16.mxu0 0
      %413 = vmatpush1.bf16.xpose.msra.mxu0 0
      %414 = vmatprep.subr.bf16.mxu0 0
      %415 = vmatpush1.bf16.xpose.msra.mxu0 0
      %416 = vmatprep.subr.bf16.mxu0 0
      %417 = vmatpush1.bf16.xpose.msra.mxu0 0
      %418 = vmatprep.subr.bf16.mxu0 0
      %419 = vmatpush1.bf16.xpose.msra.mxu0 0
      %420 = vmatprep.subr.bf16.mxu0 0
      %421 = vmatpush1.bf16.xpose.msra.mxu0 %v404
      %422 = vmatprep.subr.bf16.mxu0 0
      %423 = vmatpush2.bf16.xpose.msra.mxu0 0
      %424 = vmatprep.subr.bf16.mxu0 0
      %425 = vmatpush2.bf16.xpose.msra.mxu0 0
      %426 = vmatprep.subr.bf16.mxu0 0
      %427 = vmatpush2.bf16.xpose.msra.mxu0 0
      %428 = vmatprep.subr.bf16.mxu0 0
      %429 = vmatpush2.bf16.xpose.msra.mxu0 0
      %430 = vmatprep.subr.bf16.mxu0 0
      %431 = vmatpush2.bf16.xpose.msra.mxu0 0
      %432 = vmatprep.subr.bf16.mxu0 0
      %433 = vmatpush2.bf16.xpose.msra.mxu0 0
      %434 = vmatprep.subr.bf16.mxu0 0
      %435 = vmatpush2.bf16.xpose.msra.mxu0 0
      %436 = vmatprep.subr.bf16.mxu0 0
      %437 = vmatpush2.bf16.xpose.msra.mxu0 0
      %438 = vmatprep.mubr.bf16.mxu0 0
      %439 = vmatmul.mubr.bf16.gmra.mxu0 %v401
      %v440 = vpop.f32.mrf.mxu0
      %v441 = vadd.f32 %v397, %v440
      %v442 = vpop.f32.mrf.mxu0
      %v443 = vpop.f32.mrf.mxu0
      %v444 = vpop.f32.mrf.mxu0
      %445 = vdwg.mxu0
      %v446 = vld [vmem:[#allocation3] sm:$0xff]
      %vm447 = vcmask 64512
      %v448 = vsel %vm447, %v441, -inf
      %449 = vmax.xlane.f32.xlu0 %v448
      %v450 = vpop.xlane.xlu0 %449
      %v451 = vmax.f32 %v446, %v450
      %v452 = vsub.f32 %v446, %v451
      %v453 = vmul.f32 %v452, 1.442695
      %v454 = vpow.pop %v453
      %456 = vset.pattern.permute.xlu0 0
      %457 = vperm.xlu0 %456, %v451
      %v458 = vpop.permute.xlu0 %457
      %v460 = vsub.f32 %v441, %v458
      %v461 = vmul.f32 %v460, 1.442695
      %v462 = vpow.pop %v461
      %v463 = vld [vmem:[#allocation4] sm:$0xff]
      %v464 = vmul.f32 %v454, %v463
      %v465 = vsel %vm447, %v462, 0.0
      %466 = vadd.xlane.f32.xlu0 %v465
      %v467 = vpop.xlane.xlu0 %466
      %v468 = vadd.f32 %v464, %v467
      %vm469 = vcmask 7168
      %470 = vst.msk [vmem:[#allocation4] sm:$0xff] %vm469, %v468
      %v471 = vld [vmem:[#allocation5] sm:$0xff]
      %473 = vset.pattern.permute.xlu0 0
      %474 = vperm.xlu0 %473, %v454
      %v475 = vpop.permute.xlu0 %474
      %v477 = vmul.f32 %v475, %v471
      %v478 = vpack.c.bf16 %v462, %v462
      %v480 = vsel %vm447, %v478, 0
      %vm482 = vcmask 1043456
      %v484 = vsel %vm482, %v388, 0
      %486 = vmatprep.subr.bf16.mxu0 0
      %487 = vmatpush1.bf16.msra.mxu0 0
      %488 = vmatprep.subr.bf16.mxu0 0
      %489 = vmatpush1.bf16.msra.mxu0 0
      %490 = vmatprep.subr.bf16.mxu0 0
      %491 = vmatpush1.bf16.msra.mxu0 0
      %492 = vmatprep.subr.bf16.mxu0 0
      %493 = vmatpush1.bf16.msra.mxu0 0
      %494 = vmatprep.subr.bf16.mxu0 0
      %495 = vmatpush1.bf16.msra.mxu0 0
      %496 = vmatprep.subr.bf16.mxu0 0
      %497 = vmatpush1.bf16.msra.mxu0 0
      %498 = vmatprep.subr.bf16.mxu0 0
      %499 = vmatpush1.bf16.msra.mxu0 0
      %500 = vmatprep.subr.bf16.mxu0 0
      %501 = vmatpush1.bf16.msra.mxu0 %v484
      %502 = vmatprep.subr.bf16.mxu0 0
      %503 = vmatpush2.bf16.msra.mxu0 0
      %504 = vmatprep.subr.bf16.mxu0 0
      %505 = vmatpush2.bf16.msra.mxu0 0
      %506 = vmatprep.subr.bf16.mxu0 0
      %507 = vmatpush2.bf16.msra.mxu0 0
      %508 = vmatprep.subr.bf16.mxu0 0
      %509 = vmatpush2.bf16.msra.mxu0 0
      %510 = vmatprep.subr.bf16.mxu0 0
      %511 = vmatpush2.bf16.msra.mxu0 0
      %512 = vmatprep.subr.bf16.mxu0 0
      %513 = vmatpush2.bf16.msra.mxu0 0
      %514 = vmatprep.subr.bf16.mxu0 0
      %515 = vmatpush2.bf16.msra.mxu0 0
      %516 = vmatprep.subr.bf16.mxu0 0
      %517 = vmatpush2.bf16.msra.mxu0 0
      %518 = vmatprep.mubr.bf16.mxu0 0
      %519 = vmatmul.mubr.bf16.gmra.mxu0 %v480
      %v520 = vpop.f32.mrf.mxu0
      %v521 = vadd.f32 0.0, %v520
      %v522 = vpop.f32.mrf.mxu0
      %v523 = vpop.f32.mrf.mxu0
      %v524 = vpop.f32.mrf.mxu0
      %525 = vdwg.mxu0
      %v526 = vadd.f32 %v477, %v521
      %527 = vst.msk [vmem:[#allocation5] sm:$0xff] %vm399, %v526
      %528 = vst.msk [vmem:[#allocation3] sm:$0xff] %vm469, %v451
      %v529 = vld [vmem:[#allocation2] sm:$0xf]
      %v531 = vunpack.c.l.b16 %v529
      %v532 = vpack.c.b16 %v531, %v531
      %533 = vrot.lane.b32.xlu0 %v532, 96
      %v534 = vpop.permute.xlu0 %533
      %v536 = vunpack.c.l.b16 %v387
      %v537 = vpack.c.b16 %v536, %v536
      %538 = vrot.lane.b32.xlu0 %v537, 96
      %v539 = vpop.permute.xlu0 %538
      %v541 = vsel %vm399, %v534, 0
      %v544 = vsel %vm399, %v539, 0
      %546 = vmatprep.subr.bf16.mxu0 0
      %547 = vmatpush1.bf16.xpose.msra.mxu0 0
      %548 = vmatprep.subr.bf16.mxu0 0
      %549 = vmatpush1.bf16.xpose.msra.mxu0 0
      %550 = vmatprep.subr.bf16.mxu0 0
      %551 = vmatpush1.bf16.xpose.msra.mxu0 0
      %552 = vmatprep.subr.bf16.mxu0 0
      %553 = vmatpush1.bf16.xpose.msra.mxu0 0
      %554 = vmatprep.subr.bf16.mxu0 0
      %555 = vmatpush1.bf16.xpose.msra.mxu0 0
      %556 = vmatprep.subr.bf16.mxu0 0
      %557 = vmatpush1.bf16.xpose.msra.mxu0 0
      %558 = vmatprep.subr.bf16.mxu0 0
      %559 = vmatpush1.bf16.xpose.msra.mxu0 0
      %560 = vmatprep.subr.bf16.mxu0 0
      %561 = vmatpush1.bf16.xpose.msra.mxu0 %v544
      %562 = vmatprep.subr.bf16.mxu0 0
      %563 = vmatpush2.bf16.xpose.msra.mxu0 0
      %564 = vmatprep.subr.bf16.mxu0 0
      %565 = vmatpush2.bf16.xpose.msra.mxu0 0
      %566 = vmatprep.subr.bf16.mxu0 0
      %567 = vmatpush2.bf16.xpose.msra.mxu0 0
      %568 = vmatprep.subr.bf16.mxu0 0
      %569 = vmatpush2.bf16.xpose.msra.mxu0 0
      %570 = vmatprep.subr.bf16.mxu0 0
      %571 = vmatpush2.bf16.xpose.msra.mxu0 0
      %572 = vmatprep.subr.bf16.mxu0 0
      %573 = vmatpush2.bf16.xpose.msra.mxu0 0
      %574 = vmatprep.subr.bf16.mxu0 0
      %575 = vmatpush2.bf16.xpose.msra.mxu0 0
      %576 = vmatprep.subr.bf16.mxu0 0
      %577 = vmatpush2.bf16.xpose.msra.mxu0 0
      %578 = vmatprep.mubr.bf16.mxu0 0
      %579 = vmatmul.mubr.bf16.gmra.mxu0 %v541
      %v580 = vpop.f32.mrf.mxu0
      %v581 = vadd.f32 %v397, %v580
      %v582 = vpop.f32.mrf.mxu0
      %v583 = vpop.f32.mrf.mxu0
      %v584 = vpop.f32.mrf.mxu0
      %585 = vdwg.mxu0
      %s586 = scalar_lea.vmem [#allocation3], 8
      %v587 = vld [vmem:[%s586] sm:$0xff]
      %v588 = vsel %vm447, %v581, -inf
      %589 = vmax.xlane.f32.xlu0 %v588
      %v590 = vpop.xlane.xlu0 %589
      %v591 = vmax.f32 %v587, %v590
      %v592 = vsub.f32 %v587, %v591
      %v593 = vmul.f32 %v592, 1.442695
      %v594 = vpow.pop %v593
      %596 = vset.pattern.permute.xlu0 0
      %597 = vperm.xlu0 %596, %v591
      %v598 = vpop.permute.xlu0 %597
      %v600 = vsub.f32 %v581, %v598
      %v601 = vmul.f32 %v600, 1.442695
      %v602 = vpow.pop %v601
      %s603 = scalar_lea.vmem [#allocation4], 8
      %v604 = vld [vmem:[%s603] sm:$0xff]
      %v605 = vmul.f32 %v594, %v604
      %v606 = vsel %vm447, %v602, 0.0
      %607 = vadd.xlane.f32.xlu0 %v606
      %v608 = vpop.xlane.xlu0 %607
      %v609 = vadd.f32 %v605, %v608
      %610 = vst.msk [vmem:[%s603] sm:$0xff] %vm469, %v609
      %v611 = vld [vmem:[#allocation5] sm:$0xff]
      %613 = vset.pattern.permute.xlu0 0
      %614 = vperm.xlu0 %613, %v594
      %v615 = vpop.permute.xlu0 %614
      %v617 = vmul.f32 %v615, %v611
      %v618 = vpack.c.bf16 %v602, %v602
      %v620 = vunpack.c.l.b16 %v388
      %v621 = vpack.c.b16 %v620, %v620
      %622 = vrot.lane.b32.xlu0 %v621, 96
      %v623 = vpop.permute.xlu0 %622
      %v625 = vsel %vm447, %v618, 0
      %v628 = vsel %vm482, %v623, 0
      %630 = vmatprep.subr.bf16.mxu0 0
      %631 = vmatpush1.bf16.msra.mxu0 0
      %632 = vmatprep.subr.bf16.mxu0 0
      %633 = vmatpush1.bf16.msra.mxu0 0
      %634 = vmatprep.subr.bf16.mxu0 0
      %635 = vmatpush1.bf16.msra.mxu0 0
      %636 = vmatprep.subr.bf16.mxu0 0
      %637 = vmatpush1.bf16.msra.mxu0 0
      %638 = vmatprep.subr.bf16.mxu0 0
      %639 = vmatpush1.bf16.msra.mxu0 0
      %640 = vmatprep.subr.bf16.mxu0 0
      %641 = vmatpush1.bf16.msra.mxu0 0
      %642 = vmatprep.subr.bf16.mxu0 0
      %643 = vmatpush1.bf16.msra.mxu0 0
      %644 = vmatprep.subr.bf16.mxu0 0
      %645 = vmatpush1.bf16.msra.mxu0 %v628
      %646 = vmatprep.subr.bf16.mxu0 0
      %647 = vmatpush2.bf16.msra.mxu0 0
      %648 = vmatprep.subr.bf16.mxu0 0
      %649 = vmatpush2.bf16.msra.mxu0 0
      %650 = vmatprep.subr.bf16.mxu0 0
      %651 = vmatpush2.bf16.msra.mxu0 0
      %652 = vmatprep.subr.bf16.mxu0 0
      %653 = vmatpush2.bf16.msra.mxu0 0
      %654 = vmatprep.subr.bf16.mxu0 0
      %655 = vmatpush2.bf16.msra.mxu0 0
      %656 = vmatprep.subr.bf16.mxu0 0
      %657 = vmatpush2.bf16.msra.mxu0 0
      %658 = vmatprep.subr.bf16.mxu0 0
      %659 = vmatpush2.bf16.msra.mxu0 0
      %660 = vmatprep.subr.bf16.mxu0 0
      %661 = vmatpush2.bf16.msra.mxu0 0
      %662 = vmatprep.mubr.bf16.mxu0 0
      %663 = vmatmul.mubr.bf16.gmra.mxu0 %v625
      %v664 = vpop.f32.mrf.mxu0
      %v665 = vadd.f32 0.0, %v664
      %v666 = vpop.f32.mrf.mxu0
      %v667 = vpop.f32.mrf.mxu0
      %v668 = vpop.f32.mrf.mxu0
      %669 = vdwg.mxu0
      %671 = vrot.lane.b32.xlu0 %v665, 32
      %v672 = vpop.permute.xlu0 %671
      %v674 = vadd.f32 %v617, %v672
      %vm675 = vcmask 523520
      %676 = vst.msk [vmem:[#allocation5] sm:$0xff] %vm675, %v674
      %677 = vst.msk [vmem:[%s586] sm:$0xff] %vm469, %v591
      %v678 = vld [vmem:[#allocation2] sm:$0xf]
      %v680 = vunpack.c.l.b16 %v678
      %v681 = vpack.c.b16 %v680, %v680
      %682 = vrot.lane.b32.xlu0 %v681, 64
      %v683 = vpop.permute.xlu0 %682
      %684 = vrot.lane.b32.xlu0 %v537, 64
      %v685 = vpop.permute.xlu0 %684
      %v687 = vsel %vm399, %v683, 0
      %v690 = vsel %vm399, %v685, 0
      %692 = vmatprep.subr.bf16.mxu0 0
      %693 = vmatpush1.bf16.xpose.msra.mxu0 0
      %694 = vmatprep.subr.bf16.mxu0 0
      %695 = vmatpush1.bf16.xpose.msra.mxu0 0
      %696 = vmatprep.subr.bf16.mxu0 0
      %697 = vmatpush1.bf16.xpose.msra.mxu0 0
      %698 = vmatprep.subr.bf16.mxu0 0
      %699 = vmatpush1.bf16.xpose.msra.mxu0 0
      %700 = vmatprep.subr.bf16.mxu0 0
      %701 = vmatpush1.bf16.xpose.msra.mxu0 0
      %702 = vmatprep.subr.bf16.mxu0 0
      %703 = vmatpush1.bf16.xpose.msra.mxu0 0
      %704 = vmatprep.subr.bf16.mxu0 0
      %705 = vmatpush1.bf16.xpose.msra.mxu0 0
      %706 = vmatprep.subr.bf16.mxu0 0
      %707 = vmatpush1.bf16.xpose.msra.mxu0 %v690
      %708 = vmatprep.subr.bf16.mxu0 0
      %709 = vmatpush2.bf16.xpose.msra.mxu0 0
      %710 = vmatprep.subr.bf16.mxu0 0
      %711 = vmatpush2.bf16.xpose.msra.mxu0 0
      %712 = vmatprep.subr.bf16.mxu0 0
      %713 = vmatpush2.bf16.xpose.msra.mxu0 0
      %714 = vmatprep.subr.bf16.mxu0 0
      %715 = vmatpush2.bf16.xpose.msra.mxu0 0
      %716 = vmatprep.subr.bf16.mxu0 0
      %717 = vmatpush2.bf16.xpose.msra.mxu0 0
      %718 = vmatprep.subr.bf16.mxu0 0
      %719 = vmatpush2.bf16.xpose.msra.mxu0 0
      %720 = vmatprep.subr.bf16.mxu0 0
      %721 = vmatpush2.bf16.xpose.msra.mxu0 0
      %722 = vmatprep.subr.bf16.mxu0 0
      %723 = vmatpush2.bf16.xpose.msra.mxu0 0
      %724 = vmatprep.mubr.bf16.mxu0 0
      %725 = vmatmul.mubr.bf16.gmra.mxu0 %v687
      %v726 = vpop.f32.mrf.mxu0
      %v727 = vadd.f32 %v397, %v726
      %v728 = vpop.f32.mrf.mxu0
      %v729 = vpop.f32.mrf.mxu0
      %v730 = vpop.f32.mrf.mxu0
      %731 = vdwg.mxu0
      %s732 = scalar_lea.vmem [#allocation3], 16
      %v733 = vld [vmem:[%s732] sm:$0xff]
      %v734 = vsel %vm447, %v727, -inf
      %735 = vmax.xlane.f32.xlu0 %v734
      %v736 = vpop.xlane.xlu0 %735
      %v737 = vmax.f32 %v733, %v736
      %v738 = vsub.f32 %v733, %v737
      %v739 = vmul.f32 %v738, 1.442695
      %v740 = vpow.pop %v739
      %742 = vset.pattern.permute.xlu0 0
      %743 = vperm.xlu0 %742, %v737
      %v744 = vpop.permute.xlu0 %743
      %v746 = vsub.f32 %v727, %v744
      %v747 = vmul.f32 %v746, 1.442695
      %v748 = vpow.pop %v747
      %s749 = scalar_lea.vmem [#allocation4], 16
      %v750 = vld [vmem:[%s749] sm:$0xff]
      %v751 = vmul.f32 %v740, %v750
      %v752 = vsel %vm447, %v748, 0.0
      %753 = vadd.xlane.f32.xlu0 %v752
      %v754 = vpop.xlane.xlu0 %753
      %v755 = vadd.f32 %v751, %v754
      %756 = vst.msk [vmem:[%s749] sm:$0xff] %vm469, %v755
      %v757 = vld [vmem:[#allocation5] sm:$0xff]
      %759 = vset.pattern.permute.xlu0 0
      %760 = vperm.xlu0 %759, %v740
      %v761 = vpop.permute.xlu0 %760
      %v763 = vmul.f32 %v761, %v757
      %v764 = vpack.c.bf16 %v748, %v748
      %765 = vrot.lane.b32.xlu0 %v621, 64
      %v766 = vpop.permute.xlu0 %765
      %v768 = vsel %vm447, %v764, 0
      %v771 = vsel %vm482, %v766, 0
      %773 = vmatprep.subr.bf16.mxu0 0
      %774 = vmatpush1.bf16.msra.mxu0 0
      %775 = vmatprep.subr.bf16.mxu0 0
      %776 = vmatpush1.bf16.msra.mxu0 0
      %777 = vmatprep.subr.bf16.mxu0 0
      %778 = vmatpush1.bf16.msra.mxu0 0
      %779 = vmatprep.subr.bf16.mxu0 0
      %780 = vmatpush1.bf16.msra.mxu0 0
      %781 = vmatprep.subr.bf16.mxu0 0
      %782 = vmatpush1.bf16.msra.mxu0 0
      %783 = vmatprep.subr.bf16.mxu0 0
      %784 = vmatpush1.bf16.msra.mxu0 0
      %785 = vmatprep.subr.bf16.mxu0 0
      %786 = vmatpush1.bf16.msra.mxu0 0
      %787 = vmatprep.subr.bf16.mxu0 0
      %788 = vmatpush1.bf16.msra.mxu0 %v771
      %789 = vmatprep.subr.bf16.mxu0 0
      %790 = vmatpush2.bf16.msra.mxu0 0
      %791 = vmatprep.subr.bf16.mxu0 0
      %792 = vmatpush2.bf16.msra.mxu0 0
      %793 = vmatprep.subr.bf16.mxu0 0
      %794 = vmatpush2.bf16.msra.mxu0 0
      %795 = vmatprep.subr.bf16.mxu0 0
      %796 = vmatpush2.bf16.msra.mxu0 0
      %797 = vmatprep.subr.bf16.mxu0 0
      %798 = vmatpush2.bf16.msra.mxu0 0
      %799 = vmatprep.subr.bf16.mxu0 0
      %800 = vmatpush2.bf16.msra.mxu0 0
      %801 = vmatprep.subr.bf16.mxu0 0
      %802 = vmatpush2.bf16.msra.mxu0 0
      %803 = vmatprep.subr.bf16.mxu0 0
      %804 = vmatpush2.bf16.msra.mxu0 0
      %805 = vmatprep.mubr.bf16.mxu0 0
      %806 = vmatmul.mubr.bf16.gmra.mxu0 %v768
      %v807 = vpop.f32.mrf.mxu0
      %v808 = vadd.f32 0.0, %v807
      %v809 = vpop.f32.mrf.mxu0
      %v810 = vpop.f32.mrf.mxu0
      %v811 = vpop.f32.mrf.mxu0
      %812 = vdwg.mxu0
      %814 = vrot.lane.b32.xlu0 %v808, 64
      %v815 = vpop.permute.xlu0 %814
      %v817 = vadd.f32 %v763, %v815
      %vm818 = vcmask 785920
      %819 = vst.msk [vmem:[#allocation5] sm:$0xff] %vm818, %v817
      %820 = vst.msk [vmem:[%s732] sm:$0xff] %vm469, %v737
      %v821 = vld [vmem:[#allocation2] sm:$0xf]
      %v823 = vunpack.c.l.b16 %v821
      %v824 = vpack.c.b16 %v823, %v823
      %825 = vrot.lane.b32.xlu0 %v824, 32
      %v826 = vpop.permute.xlu0 %825
      %827 = vrot.lane.b32.xlu0 %v537, 32
      %v828 = vpop.permute.xlu0 %827
      %v830 = vsel %vm399, %v826, 0
      %v833 = vsel %vm399, %v828, 0
      %835 = vmatprep.subr.bf16.mxu0 0
      %836 = vmatpush1.bf16.xpose.msra.mxu0 0
      %837 = vmatprep.subr.bf16.mxu0 0
      %838 = vmatpush1.bf16.xpose.msra.mxu0 0
      %839 = vmatprep.subr.bf16.mxu0 0
      %840 = vmatpush1.bf16.xpose.msra.mxu0 0
      %841 = vmatprep.subr.bf16.mxu0 0
      %842 = vmatpush1.bf16.xpose.msra.mxu0 0
      %843 = vmatprep.subr.bf16.mxu0 0
      %844 = vmatpush1.bf16.xpose.msra.mxu0 0
      %845 = vmatprep.subr.bf16.mxu0 0
      %846 = vmatpush1.bf16.xpose.msra.mxu0 0
      %847 = vmatprep.subr.bf16.mxu0 0
      %848 = vmatpush1.bf16.xpose.msra.mxu0 0
      %849 = vmatprep.subr.bf16.mxu0 0
      %850 = vmatpush1.bf16.xpose.msra.mxu0 %v833
      %851 = vmatprep.subr.bf16.mxu0 0
      %852 = vmatpush2.bf16.xpose.msra.mxu0 0
      %853 = vmatprep.subr.bf16.mxu0 0
      %854 = vmatpush2.bf16.xpose.msra.mxu0 0
      %855 = vmatprep.subr.bf16.mxu0 0
      %856 = vmatpush2.bf16.xpose.msra.mxu0 0
      %857 = vmatprep.subr.bf16.mxu0 0
      %858 = vmatpush2.bf16.xpose.msra.mxu0 0
      %859 = vmatprep.subr.bf16.mxu0 0
      %860 = vmatpush2.bf16.xpose.msra.mxu0 0
      %861 = vmatprep.subr.bf16.mxu0 0
      %862 = vmatpush2.bf16.xpose.msra.mxu0 0
      %863 = vmatprep.subr.bf16.mxu0 0
      %864 = vmatpush2.bf16.xpose.msra.mxu0 0
      %865 = vmatprep.subr.bf16.mxu0 0
      %866 = vmatpush2.bf16.xpose.msra.mxu0 0
      %867 = vmatprep.mubr.bf16.mxu0 0
      %868 = vmatmul.mubr.bf16.gmra.mxu0 %v830
      %v869 = vpop.f32.mrf.mxu0
      %v870 = vadd.f32 %v397, %v869
      %v871 = vpop.f32.mrf.mxu0
      %v872 = vpop.f32.mrf.mxu0
      %v873 = vpop.f32.mrf.mxu0
      %874 = vdwg.mxu0
      %s875 = scalar_lea.vmem [#allocation3], 24
      %v876 = vld [vmem:[%s875] sm:$0xff]
      %v877 = vsel %vm447, %v870, -inf
      %878 = vmax.xlane.f32.xlu0 %v877
      %v879 = vpop.xlane.xlu0 %878
      %v880 = vmax.f32 %v876, %v879
      %v881 = vsub.f32 %v876, %v880
      %v882 = vmul.f32 %v881, 1.442695
      %v883 = vpow.pop %v882
      %885 = vset.pattern.permute.xlu0 0
      %886 = vperm.xlu0 %885, %v880
      %v887 = vpop.permute.xlu0 %886
      %v889 = vsub.f32 %v870, %v887
      %v890 = vmul.f32 %v889, 1.442695
      %v891 = vpow.pop %v890
      %s892 = scalar_lea.vmem [#allocation4], 24
      %v893 = vld [vmem:[%s892] sm:$0xff]
      %v894 = vmul.f32 %v883, %v893
      %v895 = vsel %vm447, %v891, 0.0
      %896 = vadd.xlane.f32.xlu0 %v895
      %v897 = vpop.xlane.xlu0 %896
      %v898 = vadd.f32 %v894, %v897
      %899 = vst.msk [vmem:[%s892] sm:$0xff] %vm469, %v898
      %v900 = vld [vmem:[#allocation5] sm:$0xff]
      %902 = vset.pattern.permute.xlu0 0
      %903 = vperm.xlu0 %902, %v883
      %v904 = vpop.permute.xlu0 %903
      %v906 = vmul.f32 %v904, %v900
      %v907 = vpack.c.bf16 %v891, %v891
      %908 = vrot.lane.b32.xlu0 %v621, 32
      %v909 = vpop.permute.xlu0 %908
      %v911 = vsel %vm447, %v907, 0
      %v914 = vsel %vm482, %v909, 0
      %916 = vmatprep.subr.bf16.mxu0 0
      %917 = vmatpush1.bf16.msra.mxu0 0
      %918 = vmatprep.subr.bf16.mxu0 0
      %919 = vmatpush1.bf16.msra.mxu0 0
      %920 = vmatprep.subr.bf16.mxu0 0
      %921 = vmatpush1.bf16.msra.mxu0 0
      %922 = vmatprep.subr.bf16.mxu0 0
      %923 = vmatpush1.bf16.msra.mxu0 0
      %924 = vmatprep.subr.bf16.mxu0 0
      %925 = vmatpush1.bf16.msra.mxu0 0
      %926 = vmatprep.subr.bf16.mxu0 0
      %927 = vmatpush1.bf16.msra.mxu0 0
      %928 = vmatprep.subr.bf16.mxu0 0
      %929 = vmatpush1.bf16.msra.mxu0 0
      %930 = vmatprep.subr.bf16.mxu0 0
      %931 = vmatpush1.bf16.msra.mxu0 %v914
      %932 = vmatprep.subr.bf16.mxu0 0
      %933 = vmatpush2.bf16.msra.mxu0 0
      %934 = vmatprep.subr.bf16.mxu0 0
      %935 = vmatpush2.bf16.msra.mxu0 0
      %936 = vmatprep.subr.bf16.mxu0 0
      %937 = vmatpush2.bf16.msra.mxu0 0
      %938 = vmatprep.subr.bf16.mxu0 0
      %939 = vmatpush2.bf16.msra.mxu0 0
      %940 = vmatprep.subr.bf16.mxu0 0
      %941 = vmatpush2.bf16.msra.mxu0 0
      %942 = vmatprep.subr.bf16.mxu0 0
      %943 = vmatpush2.bf16.msra.mxu0 0
      %944 = vmatprep.subr.bf16.mxu0 0
      %945 = vmatpush2.bf16.msra.mxu0 0
      %946 = vmatprep.subr.bf16.mxu0 0
      %947 = vmatpush2.bf16.msra.mxu0 0
      %948 = vmatprep.mubr.bf16.mxu0 0
      %949 = vmatmul.mubr.bf16.gmra.mxu0 %v911
      %v950 = vpop.f32.mrf.mxu0
      %v951 = vadd.f32 0.0, %v950
      %v952 = vpop.f32.mrf.mxu0
      %v953 = vpop.f32.mrf.mxu0
      %v954 = vpop.f32.mrf.mxu0
      %955 = vdwg.mxu0
      %957 = vrot.lane.b32.xlu0 %v951, 96
      %v958 = vpop.permute.xlu0 %957
      %v960 = vadd.f32 %v906, %v958
      %vm961 = vcmask 1048320
      %962 = vst.msk [vmem:[#allocation5] sm:$0xff] %vm961, %v960
      %963 = vst.msk [vmem:[%s875] sm:$0xff] %vm469, %v880
      // Predicated region
      $region45: #{full_attention.1} parent=39 // pred_check
        %p964 = pneg %p368
      $region46: #{full_attention.1} parent=39 // pred_check_branch
        %966 = sbr.rel (%p964) target = $region48
      $region47: #{full_attention.1} parent=39 // pred_region
        %v967 = vld [vmem:[%s353] sm:$0xff]
        %vm968 = vcmp.gt.f32.partialorder %v967, 0.0
        %v969 = vld [vmem:[#allocation4] sm:$0xff]
        %v970 = vrcp.pop %v969
        %v971 = vld [vmem:[#allocation5] sm:$0xff]
        %973 = vset.pattern.permute.xlu0 0
        %974 = vperm.xlu0 %973, %v970
        %v975 = vpop.permute.xlu0 %974
        %v977 = vmul.f32 %v971, %v975
        %v978 = vld [vmem:[#allocation3] sm:$0xff]
        %vm979 = vcmp.gt.f32.partialorder %v978, -1e+29
        %vm980 = vmand %vm979, %vm968
        %v981 = vsel %vm980, 1, 0
        %982 = vset.pattern.permute.xlu0 0
        %983 = vperm.xlu0 %982, %v981
        %v984 = vpop.permute.xlu0 %983
        %vm985 = vcmp.eq.s32.totalorder %v984, 1
        %v986 = vsel %vm985, %v977, 0.0
        %v987 = vld [vmem:[%s603] sm:$0xff]
        %v988 = vrcp.pop %v987
        %990 = vset.pattern.permute.xlu0 0
        %991 = vperm.xlu0 %990, %v988
        %v992 = vpop.permute.xlu0 %991
        %v994 = vmul.f32 %v971, %v992
        %v995 = vld [vmem:[%s586] sm:$0xff]
        %vm996 = vcmp.gt.f32.partialorder %v995, -1e+29
        %vm997 = vmand %vm996, %vm968
        %v998 = vsel %vm997, 1, 0
        %999 = vset.pattern.permute.xlu0 0
        %1000 = vperm.xlu0 %999, %v998
        %v1001 = vpop.permute.xlu0 %1000
        %vm1002 = vcmp.eq.s32.totalorder %v1001, 1
        %v1003 = vsel %vm1002, %v994, 0.0
        %v1004 = vld [vmem:[%s749] sm:$0xff]
        %v1005 = vrcp.pop %v1004
        %1007 = vset.pattern.permute.xlu0 0
        %1008 = vperm.xlu0 %1007, %v1005
        %v1009 = vpop.permute.xlu0 %1008
        %v1011 = vmul.f32 %v971, %v1009
        %v1012 = vld [vmem:[%s732] sm:$0xff]
        %vm1013 = vcmp.gt.f32.partialorder %v1012, -1e+29
        %vm1014 = vmand %vm1013, %vm968
        %v1015 = vsel %vm1014, 1, 0
        %1016 = vset.pattern.permute.xlu0 0
        %1017 = vperm.xlu0 %1016, %v1015
        %v1018 = vpop.permute.xlu0 %1017
        %vm1019 = vcmp.eq.s32.totalorder %v1018, 1
        %v1020 = vsel %vm1019, %v1011, 0.0
        %v1021 = vld [vmem:[%s892] sm:$0xff]
        %v1022 = vrcp.pop %v1021
        %1024 = vset.pattern.permute.xlu0 0
        %1025 = vperm.xlu0 %1024, %v1022
        %v1026 = vpop.permute.xlu0 %1025
        %v1028 = vmul.f32 %v971, %v1026
        %v1029 = vld [vmem:[%s875] sm:$0xff]
        %vm1030 = vcmp.gt.f32.partialorder %v1029, -1e+29
        %vm1031 = vmand %vm1030, %vm968
        %v1032 = vsel %vm1031, 1, 0
        %1033 = vset.pattern.permute.xlu0 0
        %1034 = vperm.xlu0 %1033, %v1032
        %v1035 = vpop.permute.xlu0 %1034
        %vm1036 = vcmp.eq.s32.totalorder %v1035, 1
        %v1037 = vsel %vm1036, %v1028, 0.0
        %v1038 = vsel %vm399, %v986, %v1003
        %vm1039 = vcmask 523264
        %v1040 = vsel %vm1039, %v1038, %v1020
        %vm1041 = vcmask 785408
        %v1042 = vsel %vm1041, %v1040, %v1037
        %1043 = vst [vmem:[%s366] sm:$0xff] %v1042
      $region48: #{full_attention.1} parent=39 // pred_fallthru
        _
      %p1044 = scmp.lt.s32.totalorder %s21, 1
      %s1045 = scalar_select %p1044, %s21, 1
      %p1046 = scmp.lt.s32.totalorder %s22, 0
      %s1047 = scalar_select %p1046, %s22, 0
      %s1048 = sadd.s32 %s1047, %s1045
      %s1049 = smul.addr %s1048, 8
      %s1050 = scalar_lea.vmem %s5, %s1049
      // Predicated region
      $region49: #{full_attention.1} parent=39 // pred_check
        %p1051 = pneg %p195
      $region50: #{full_attention.1} parent=39 // pred_check_branch
        %1053 = sbr.rel (%p1051) target = $region52
      $region51: #{full_attention.1} parent=39 // pred_region
        _
      $region52: #{full_attention.1} parent=39 // pred_fallthru
        _
    $region40: #{full_attention.1} parent=5 // pred_fallthru
      _
    %p1054 = scmp.le.s32.totalorder 2, %s11
    // Predicated region
    $region53: #{full_attention.1} parent=5 // pred_check
      %p1055 = pneg %p1054
    $region54: #{full_attention.1} parent=5 // pred_check_branch
      %1057 = sbr.rel (%p1055) target = $region56
    $region55: #{full_attention.1} parent=5 // pred_region
      %s1058 = ssub.s32 %s11, 2
      // Predicated region
      $region57: #{full_attention.1} parent=55 // pred_check
        %p1059 = pneg %p201
      $region58: #{full_attention.1} parent=55 // pred_check_branch
        %1061 = sbr.rel (%p1059) target = $region60
      $region59: #{full_attention.1} parent=55 // pred_region
        %p1062 = scmp.lt.s32.totalorder %s24, 1
        %s1063 = scalar_select %p1062, %s24, 1
        %p1064 = scmp.lt.s32.totalorder %s25, 0
        %s1065 = scalar_select %p1064, %s25, 0
        %s1066 = sadd.s32 %s1065, %s1063
        %s1067 = smul.addr %s1066, 8
        %s1068 = scalar_lea.vmem %s5, %s1067
      $region60: #{full_attention.1} parent=55 // pred_fallthru
        _
    $region56: #{full_attention.1} parent=5 // pred_fallthru
      _
  $region6: #{full_attention.1} parent=0 // loop_footer
    %s15 = sadd.s32 1, %s11
  $region7: #{full_attention.1} parent=0 // loop_footer_branch
    %10 = sbr.rel target = $region3
  $region8: #{full_attention.1} parent=0 // loop_exit
    _

</llo_original>
